<compile_context>
chip_gen: v7x
topology: tpu7x:2x2x1
jax: 0.10.0
libtpu: 0.0.40
codegen_flags: <defaults>
</compile_context>

<pallas_src>
import functools

import jax
import jax.numpy as jnp
import numpy as np
from jax.experimental import pallas as pl
from jax.experimental.pallas import tpu as pltpu


def attention_kernel(x_ref, wqkv_ref, bqkv_ref, wo_ref, bo_ref, o_ref, ctx_ref,
                     *, num_heads, approx_recip):
    BB, S, E = x_ref.shape
    dh = E // num_heads

    # Fused QKV in-projection on a (BB*S, E) view: one big MXU matmul.
    x2 = x_ref[...].reshape(BB * S, E)
    qkv = jnp.dot(x2, wqkv_ref[...], preferred_element_type=jnp.float32) + bqkv_ref[...]
    qkv = qkv.reshape(BB, S, 3 * E)

    # Per-head attention, batched over BB (3-D einsums with a batch dim).
    # Heads are statically unrolled; pooled head contexts go straight into the
    # (BB, E) scratch via static slices (no concatenate of head outputs).
    for h in range(num_heads):
        lo = h * dh
        qh = qkv[:, :, lo:lo + dh]                      # (BB, S, dh) (scale pre-folded)
        kh = qkv[:, :, E + lo:E + lo + dh]              # (BB, S, dh)
        vh = qkv[:, :, 2 * E + lo:2 * E + lo + dh]      # (BB, S, dh)

        s = jnp.einsum('bqd,bkd->bqk', qh, kh,
                       preferred_element_type=jnp.float32)          # (BB, S, S)
        s = s - jnp.max(s, axis=-1, keepdims=True)
        p = jnp.exp(s)
        p = p * pl.reciprocal(jnp.sum(p, axis=-1, keepdims=True),
                              approx=approx_recip)

        # AdaptiveAvgPool1d(1) over the sequence commutes with P @ V (and with
        # the linear out-projection), so pool the attention probabilities over
        # the query axis first -> one tiny (BB,1,S) x (BB,S,dh) matmul per head.
        pbar = jnp.mean(p, axis=1, keepdims=True)                   # (BB, 1, S)
        ph = jnp.einsum('bqk,bkd->bqd', pbar, vh,
                        preferred_element_type=jnp.float32)         # (BB, 1, dh)
        ctx_ref[:, lo:lo + dh] = ph.reshape(BB, dh)

    # Output projection (pre-transposed weight) on the pooled context, then
    # the feature-wise softmax -> lane-dense (BB, E) store.
    logits = jnp.dot(ctx_ref[...], wo_ref[...],
                     preferred_element_type=jnp.float32) + bo_ref[...]
    logits = logits - jnp.max(logits, axis=-1, keepdims=True)
    e = jnp.exp(logits)
    o_ref[...] = e * pl.reciprocal(jnp.sum(e, axis=-1, keepdims=True),
                                   approx=approx_recip)


def _choose_block_batch(B, S):
    """Batch elements processed per grid step (sublane-aligned, >=2 steps when big)."""
    if B <= 8:
        return B                                   # single step; block == full batch dim
    bb = max(8, min(256 // max(S, 1), B // 2))     # target ~256 matmul rows, >=2 grid steps
    return max(8, (bb // 8) * 8)


def attention_forward(x, in_proj_w, in_proj_b, out_proj_w, out_proj_b,
                      *, num_heads, approx_recip=True):
    B, S, E = x.shape
    assert E % num_heads == 0
    dh = E // num_heads
    scale = 1.0 / float(np.sqrt(dh))

    wq, wk, wv = in_proj_w[:E], in_proj_w[E:2 * E], in_proj_w[2 * E:]
    bq, bk, bv = in_proj_b[:E], in_proj_b[E:2 * E], in_proj_b[2 * E:]

    # Fused, pre-transposed in-projection weight (E, 3E); fold 1/sqrt(dh) into
    # the Q columns so the kernel never rescales.
    wqkv_t = jnp.concatenate([wq.T * scale, wk.T, wv.T], axis=1).astype(jnp.float32)
    bqkv = jnp.concatenate([bq * scale, bk, bv])[None, :].astype(jnp.float32)
    wo_t = out_proj_w.T.astype(jnp.float32)
    bo = out_proj_b[None, :].astype(jnp.float32)

    BB = _choose_block_batch(B, S)
    B_pad = ((B + BB - 1) // BB) * BB
    x_in = x.astype(jnp.float32)
    if B_pad != B:
        # Zero-padded batch rows stay finite through both softmaxes (qkv = bias).
        x_in = jnp.pad(x_in, ((0, B_pad - B), (0, 0), (0, 0)))

    kernel = functools.partial(attention_kernel, num_heads=num_heads,
                               approx_recip=approx_recip)
    out = pl.pallas_call(
        kernel,
        out_shape=jax.ShapeDtypeStruct((B_pad, E), jnp.float32),
        grid_spec=pltpu.PrefetchScalarGridSpec(
            num_scalar_prefetch=0,
            grid=(B_pad // BB,),
            in_specs=[
                pl.BlockSpec((BB, S, E), lambda b: (b, 0, 0)),    # x (BB batch elems/step)
                pl.BlockSpec((E, 3 * E), lambda b: (0, 0)),       # Wqkv^T (scale folded)
                pl.BlockSpec((1, 3 * E), lambda b: (0, 0)),       # bqkv
                pl.BlockSpec((E, E), lambda b: (0, 0)),           # Wo^T
                pl.BlockSpec((1, E), lambda b: (0, 0)),           # bo
            ],
            out_specs=pl.BlockSpec((BB, E), lambda b: (b, 0)),    # lane-dense output tile
            scratch_shapes=[pltpu.VMEM((BB, E), jnp.float32)],    # pooled per-head contexts
        ),
        compiler_params=pltpu.CompilerParams(
            dimension_semantics=("parallel",),
            vmem_limit_bytes=32 * 1024 * 1024,
        ),
    )(x_in, wqkv_t, bqkv, wo_t, bo)
    return out[:B]                                                # (B, E)


def ref_forward(x, in_proj_w, in_proj_b, out_proj_w, out_proj_b, *, num_heads):
    """Pure-JAX reference matching torch.nn.MultiheadAttention + pooling + softmax."""
    B, S, E = x.shape
    dh = E // num_heads
    wq, wk, wv = in_proj_w[:E], in_proj_w[E:2 * E], in_proj_w[2 * E:]
    bq, bk, bv = in_proj_b[:E], in_proj_b[E:2 * E], in_proj_b[2 * E:]
    q = (x @ wq.T + bq).reshape(B, S, num_heads, dh)
    k = (x @ wk.T + bk).reshape(B, S, num_heads, dh)
    v = (x @ wv.T + bv).reshape(B, S, num_heads, dh)
    s = jnp.einsum('bqhd,bkhd->bhqk', q, k) / jnp.sqrt(jnp.float32(dh))
    p = jax.nn.softmax(s, axis=-1)
    o = jnp.einsum('bhqk,bkhd->bqhd', p, v).reshape(B, S, E)
    o = o @ out_proj_w.T + out_proj_b
    pooled = o.mean(axis=1)                                       # (B, E)
    return jax.nn.softmax(pooled, axis=-1)


if __name__ == "__main__":
    B, S, E, H = 2, 8, 32, 4   # batch, seq, model_dim, num_heads

    key = jax.random.PRNGKey(0)
    kx, kw, kb, kow, kob = jax.random.split(key, 5)

    x = jax.random.normal(kx, (B, S, E), dtype=jnp.float32)

    # Deterministic synthetic parameters (shapes match nn.MultiheadAttention).
    in_proj_w = 0.1 * jax.random.normal(kw, (3 * E, E), dtype=jnp.float32)
    in_proj_b = 0.1 * jax.random.normal(kb, (3 * E,), dtype=jnp.float32)
    out_proj_w = 0.1 * jax.random.normal(kow, (E, E), dtype=jnp.float32)
    out_proj_b = 0.1 * jax.random.normal(kob, (E,), dtype=jnp.float32)

    out = attention_forward(x, in_proj_w, in_proj_b, out_proj_w, out_proj_b,
                            num_heads=H)
    out = jax.block_until_ready(out)

    ref = ref_forward(x, in_proj_w, in_proj_b, out_proj_w, out_proj_b, num_heads=H)
    # Tolerance accounts for pl.reciprocal(approx=True) (~2^-12 relative error)
    # in the two softmax normalizations.
    np.testing.assert_allclose(np.asarray(out), np.asarray(ref), rtol=5e-3, atol=1e-5)
    assert out.shape == (B, E)
    # Rows are attention weights over features -> must sum to ~1.
    np.testing.assert_allclose(np.asarray(out).sum(-1), np.ones(B), rtol=5e-3, atol=1e-5)

    print("KERNEL_OK")
</pallas_src>

<mosaic_0001>
module attributes {stable_mosaic.version = 11 : i64} {
  func.func @attention_kernel(%arg0: i32, %arg1: memref<2x8x32xf32, #tpu.memory_space<vmem>>, %arg2: memref<32x96xf32, #tpu.memory_space<vmem>>, %arg3: memref<1x96xf32, #tpu.memory_space<vmem>>, %arg4: memref<32x32xf32, #tpu.memory_space<vmem>>, %arg5: memref<1x32xf32, #tpu.memory_space<vmem>>, %arg6: memref<2x32xf32, #tpu.memory_space<vmem>>, %arg7: memref<2x32xf32, #tpu.memory_space<vmem>>) attributes {dimension_semantics = [#tpu.dimension_semantics<parallel>], iteration_bounds = array<i64: 1>, scalar_prefetch = 0 : i64, scratch_operands = 1 : i64, tpu.core_type = #tpu.core_type<tc>, window_params = [{transform_indices = @transform_0, window_bounds = array<i64: 2, 8, 32>}, {pipeline_mode = #tpu.pipeline_mode<synchronous>, transform_indices = @transform_1, window_bounds = array<i64: 32, 96>}, {pipeline_mode = #tpu.pipeline_mode<synchronous>, transform_indices = @transform_2, window_bounds = array<i64: 1, 96>}, {pipeline_mode = #tpu.pipeline_mode<synchronous>, transform_indices = @transform_3, window_bounds = array<i64: 32, 32>}, {pipeline_mode = #tpu.pipeline_mode<synchronous>, transform_indices = @transform_4, window_bounds = array<i64: 1, 32>}, {transform_indices = @transform_5, window_bounds = array<i64: 2, 32>}]} {
    %c0 = arith.constant 0 : index
    %c0_0 = arith.constant 0 : index
    %c0_1 = arith.constant 0 : index
    %0 = vector.load %arg1[%c0, %c0_0, %c0_1] : memref<2x8x32xf32, #tpu.memory_space<vmem>>, vector<2x8x32xf32>
    %1 = vector.shape_cast %0 : vector<2x8x32xf32> to vector<16x32xf32>
    %c0_2 = arith.constant 0 : index
    %c0_3 = arith.constant 0 : index
    %2 = vector.load %arg2[%c0_2, %c0_3] : memref<32x96xf32, #tpu.memory_space<vmem>>, vector<32x96xf32>
    %cst = arith.constant dense<0.000000e+00> : vector<16x96xf32>
    %3 = tpu.matmul %1, %2, %cst {dimension_numbers = #tpu.dot_dimension_numbers<[1], [0], [0], [1], [0, 0, 1, 1], [], []>} : vector<16x32xf32>, vector<32x96xf32>, vector<16x96xf32> -> vector<16x96xf32>
    %c0_4 = arith.constant 0 : index
    %c0_5 = arith.constant 0 : index
    %4 = vector.load %arg3[%c0_4, %c0_5] : memref<1x96xf32, #tpu.memory_space<vmem>>, vector<1x96xf32>
    %5 = vector.broadcast %4 : vector<1x96xf32> to vector<16x96xf32>
    %6 = arith.addf %3, %5 : vector<16x96xf32>
    %7 = vector.shape_cast %6 : vector<16x96xf32> to vector<2x8x96xf32>
    %8 = vector.extract_strided_slice %7 {offsets = [0, 0, 0], sizes = [2, 8, 8], strides = [1, 1, 1]} : vector<2x8x96xf32> to vector<2x8x8xf32>
    %9 = vector.extract_strided_slice %7 {offsets = [0, 0, 32], sizes = [2, 8, 8], strides = [1, 1, 1]} : vector<2x8x96xf32> to vector<2x8x8xf32>
    %10 = vector.extract_strided_slice %7 {offsets = [0, 0, 64], sizes = [2, 8, 8], strides = [1, 1, 1]} : vector<2x8x96xf32> to vector<2x8x8xf32>
    "tpu.trace_start"() <{level = 10 : i32, message = "bqd,bkd->bqk"}> : () -> ()
    %cst_6 = arith.constant dense<0.000000e+00> : vector<2x8x8xf32>
    %11 = tpu.matmul %8, %9, %cst_6 {dimension_numbers = #tpu.dot_dimension_numbers<[2], [2], [1], [1], [0, 0, 0, 1, 1, 1], [0], [0]>} : vector<2x8x8xf32>, vector<2x8x8xf32>, vector<2x8x8xf32> -> vector<2x8x8xf32>
    "tpu.trace_stop"() : () -> ()
    %cst_7 = arith.constant dense<0xFF800000> : vector<2x8xf32>
    %12 = vector.multi_reduction <maximumf>, %11, %cst_7 [2] : vector<2x8x8xf32> to vector<2x8xf32>
    %13 = vector.shape_cast %12 : vector<2x8xf32> to vector<2x8x1xf32>
    %14 = vector.broadcast %13 : vector<2x8x1xf32> to vector<2x8x8xf32>
    %15 = arith.subf %11, %14 : vector<2x8x8xf32>
    %16 = math.exp %15 : vector<2x8x8xf32>
    %cst_8 = arith.constant dense<0.000000e+00> : vector<2x8xf32>
    %17 = vector.multi_reduction <add>, %16, %cst_8 [2] : vector<2x8x8xf32> to vector<2x8xf32>
    %18 = vector.shape_cast %17 : vector<2x8xf32> to vector<2x8x1xf32>
    %19 = tpu.reciprocal %18 {approx = true} : vector<2x8x1xf32> -> vector<2x8x1xf32>
    %20 = vector.broadcast %19 : vector<2x8x1xf32> to vector<2x8x8xf32>
    %21 = arith.mulf %16, %20 : vector<2x8x8xf32>
    %cst_9 = arith.constant dense<0.000000e+00> : vector<2x8xf32>
    %22 = vector.multi_reduction <add>, %21, %cst_9 [1] : vector<2x8x8xf32> to vector<2x8xf32>
    %23 = vector.shape_cast %22 : vector<2x8xf32> to vector<2x1x8xf32>
    %cst_10 = arith.constant 8.000000e+00 : f32
    %24 = vector.broadcast %cst_10 : f32 to vector<2x1x8xf32>
    %25 = arith.divf %23, %24 : vector<2x1x8xf32>
    "tpu.trace_start"() <{level = 10 : i32, message = "bqk,bkd->bqd"}> : () -> ()
    %cst_11 = arith.constant dense<0.000000e+00> : vector<2x1x8xf32>
    %26 = tpu.matmul %25, %10, %cst_11 {dimension_numbers = #tpu.dot_dimension_numbers<[2], [1], [1], [2], [0, 0, 0, 1, 1, 2], [0], [0]>} : vector<2x1x8xf32>, vector<2x8x8xf32>, vector<2x1x8xf32> -> vector<2x1x8xf32>
    "tpu.trace_stop"() : () -> ()
    %27 = vector.shape_cast %26 : vector<2x1x8xf32> to vector<2x8xf32>
    %c0_12 = arith.constant 0 : index
    %c0_13 = arith.constant 0 : index
    %28 = vector.load %arg7[%c0_12, %c0_13] : memref<2x32xf32, #tpu.memory_space<vmem>>, vector<2x8xf32>
    tpu.vector_store %arg7[%c0_12, %c0_13], %27 {strides = array<i32>} : memref<2x32xf32, #tpu.memory_space<vmem>>, vector<2x8xf32>,
    %29 = vector.extract_strided_slice %7 {offsets = [0, 0, 8], sizes = [2, 8, 8], strides = [1, 1, 1]} : vector<2x8x96xf32> to vector<2x8x8xf32>
    %30 = vector.extract_strided_slice %7 {offsets = [0, 0, 40], sizes = [2, 8, 8], strides = [1, 1, 1]} : vector<2x8x96xf32> to vector<2x8x8xf32>
    %31 = vector.extract_strided_slice %7 {offsets = [0, 0, 72], sizes = [2, 8, 8], strides = [1, 1, 1]} : vector<2x8x96xf32> to vector<2x8x8xf32>
    "tpu.trace_start"() <{level = 10 : i32, message = "bqd,bkd->bqk"}> : () -> ()
    %cst_14 = arith.constant dense<0.000000e+00> : vector<2x8x8xf32>
    %32 = tpu.matmul %29, %30, %cst_14 {dimension_numbers = #tpu.dot_dimension_numbers<[2], [2], [1], [1], [0, 0, 0, 1, 1, 1], [0], [0]>} : vector<2x8x8xf32>, vector<2x8x8xf32>, vector<2x8x8xf32> -> vector<2x8x8xf32>
    "tpu.trace_stop"() : () -> ()
    %cst_15 = arith.constant dense<0xFF800000> : vector<2x8xf32>
    %33 = vector.multi_reduction <maximumf>, %32, %cst_15 [2] : vector<2x8x8xf32> to vector<2x8xf32>
    %34 = vector.shape_cast %33 : vector<2x8xf32> to vector<2x8x1xf32>
    %35 = vector.broadcast %34 : vector<2x8x1xf32> to vector<2x8x8xf32>
    %36 = arith.subf %32, %35 : vector<2x8x8xf32>
    %37 = math.exp %36 : vector<2x8x8xf32>
    %cst_16 = arith.constant dense<0.000000e+00> : vector<2x8xf32>
    %38 = vector.multi_reduction <add>, %37, %cst_16 [2] : vector<2x8x8xf32> to vector<2x8xf32>
    %39 = vector.shape_cast %38 : vector<2x8xf32> to vector<2x8x1xf32>
    %40 = tpu.reciprocal %39 {approx = true} : vector<2x8x1xf32> -> vector<2x8x1xf32>
    %41 = vector.broadcast %40 : vector<2x8x1xf32> to vector<2x8x8xf32>
    %42 = arith.mulf %37, %41 : vector<2x8x8xf32>
    %cst_17 = arith.constant dense<0.000000e+00> : vector<2x8xf32>
    %43 = vector.multi_reduction <add>, %42, %cst_17 [1] : vector<2x8x8xf32> to vector<2x8xf32>
    %44 = vector.shape_cast %43 : vector<2x8xf32> to vector<2x1x8xf32>
    %cst_18 = arith.constant 8.000000e+00 : f32
    %45 = vector.broadcast %cst_18 : f32 to vector<2x1x8xf32>
    %46 = arith.divf %44, %45 : vector<2x1x8xf32>
    "tpu.trace_start"() <{level = 10 : i32, message = "bqk,bkd->bqd"}> : () -> ()
    %cst_19 = arith.constant dense<0.000000e+00> : vector<2x1x8xf32>
    %47 = tpu.matmul %46, %31, %cst_19 {dimension_numbers = #tpu.dot_dimension_numbers<[2], [1], [1], [2], [0, 0, 0, 1, 1, 2], [0], [0]>} : vector<2x1x8xf32>, vector<2x8x8xf32>, vector<2x1x8xf32> -> vector<2x1x8xf32>
    "tpu.trace_stop"() : () -> ()
    %48 = vector.shape_cast %47 : vector<2x1x8xf32> to vector<2x8xf32>
    %c0_20 = arith.constant 0 : index
    %c8 = arith.constant 8 : index
    %49 = vector.load %arg7[%c0_20, %c8] : memref<2x32xf32, #tpu.memory_space<vmem>>, vector<2x8xf32>
    tpu.vector_store %arg7[%c0_20, %c8], %48 {strides = array<i32>} : memref<2x32xf32, #tpu.memory_space<vmem>>, vector<2x8xf32>,
    %50 = vector.extract_strided_slice %7 {offsets = [0, 0, 16], sizes = [2, 8, 8], strides = [1, 1, 1]} : vector<2x8x96xf32> to vector<2x8x8xf32>
    %51 = vector.extract_strided_slice %7 {offsets = [0, 0, 48], sizes = [2, 8, 8], strides = [1, 1, 1]} : vector<2x8x96xf32> to vector<2x8x8xf32>
    %52 = vector.extract_strided_slice %7 {offsets = [0, 0, 80], sizes = [2, 8, 8], strides = [1, 1, 1]} : vector<2x8x96xf32> to vector<2x8x8xf32>
    "tpu.trace_start"() <{level = 10 : i32, message = "bqd,bkd->bqk"}> : () -> ()
    %cst_21 = arith.constant dense<0.000000e+00> : vector<2x8x8xf32>
    %53 = tpu.matmul %50, %51, %cst_21 {dimension_numbers = #tpu.dot_dimension_numbers<[2], [2], [1], [1], [0, 0, 0, 1, 1, 1], [0], [0]>} : vector<2x8x8xf32>, vector<2x8x8xf32>, vector<2x8x8xf32> -> vector<2x8x8xf32>
    "tpu.trace_stop"() : () -> ()
    %cst_22 = arith.constant dense<0xFF800000> : vector<2x8xf32>
    %54 = vector.multi_reduction <maximumf>, %53, %cst_22 [2] : vector<2x8x8xf32> to vector<2x8xf32>
    %55 = vector.shape_cast %54 : vector<2x8xf32> to vector<2x8x1xf32>
    %56 = vector.broadcast %55 : vector<2x8x1xf32> to vector<2x8x8xf32>
    %57 = arith.subf %53, %56 : vector<2x8x8xf32>
    %58 = math.exp %57 : vector<2x8x8xf32>
    %cst_23 = arith.constant dense<0.000000e+00> : vector<2x8xf32>
    %59 = vector.multi_reduction <add>, %58, %cst_23 [2] : vector<2x8x8xf32> to vector<2x8xf32>
    %60 = vector.shape_cast %59 : vector<2x8xf32> to vector<2x8x1xf32>
    %61 = tpu.reciprocal %60 {approx = true} : vector<2x8x1xf32> -> vector<2x8x1xf32>
    %62 = vector.broadcast %61 : vector<2x8x1xf32> to vector<2x8x8xf32>
    %63 = arith.mulf %58, %62 : vector<2x8x8xf32>
    %cst_24 = arith.constant dense<0.000000e+00> : vector<2x8xf32>
    %64 = vector.multi_reduction <add>, %63, %cst_24 [1] : vector<2x8x8xf32> to vector<2x8xf32>
    %65 = vector.shape_cast %64 : vector<2x8xf32> to vector<2x1x8xf32>
    %cst_25 = arith.constant 8.000000e+00 : f32
    %66 = vector.broadcast %cst_25 : f32 to vector<2x1x8xf32>
    %67 = arith.divf %65, %66 : vector<2x1x8xf32>
    "tpu.trace_start"() <{level = 10 : i32, message = "bqk,bkd->bqd"}> : () -> ()
    %cst_26 = arith.constant dense<0.000000e+00> : vector<2x1x8xf32>
    %68 = tpu.matmul %67, %52, %cst_26 {dimension_numbers = #tpu.dot_dimension_numbers<[2], [1], [1], [2], [0, 0, 0, 1, 1, 2], [0], [0]>} : vector<2x1x8xf32>, vector<2x8x8xf32>, vector<2x1x8xf32> -> vector<2x1x8xf32>
    "tpu.trace_stop"() : () -> ()
    %69 = vector.shape_cast %68 : vector<2x1x8xf32> to vector<2x8xf32>
    %c0_27 = arith.constant 0 : index
    %c16 = arith.constant 16 : index
    %70 = vector.load %arg7[%c0_27, %c16] : memref<2x32xf32, #tpu.memory_space<vmem>>, vector<2x8xf32>
    tpu.vector_store %arg7[%c0_27, %c16], %69 {strides = array<i32>} : memref<2x32xf32, #tpu.memory_space<vmem>>, vector<2x8xf32>,
    %71 = vector.extract_strided_slice %7 {offsets = [0, 0, 24], sizes = [2, 8, 8], strides = [1, 1, 1]} : vector<2x8x96xf32> to vector<2x8x8xf32>
    %72 = vector.extract_strided_slice %7 {offsets = [0, 0, 56], sizes = [2, 8, 8], strides = [1, 1, 1]} : vector<2x8x96xf32> to vector<2x8x8xf32>
    %73 = vector.extract_strided_slice %7 {offsets = [0, 0, 88], sizes = [2, 8, 8], strides = [1, 1, 1]} : vector<2x8x96xf32> to vector<2x8x8xf32>
    "tpu.trace_start"() <{level = 10 : i32, message = "bqd,bkd->bqk"}> : () -> ()
    %cst_28 = arith.constant dense<0.000000e+00> : vector<2x8x8xf32>
    %74 = tpu.matmul %71, %72, %cst_28 {dimension_numbers = #tpu.dot_dimension_numbers<[2], [2], [1], [1], [0, 0, 0, 1, 1, 1], [0], [0]>} : vector<2x8x8xf32>, vector<2x8x8xf32>, vector<2x8x8xf32> -> vector<2x8x8xf32>
    "tpu.trace_stop"() : () -> ()
    %cst_29 = arith.constant dense<0xFF800000> : vector<2x8xf32>
    %75 = vector.multi_reduction <maximumf>, %74, %cst_29 [2] : vector<2x8x8xf32> to vector<2x8xf32>
    %76 = vector.shape_cast %75 : vector<2x8xf32> to vector<2x8x1xf32>
    %77 = vector.broadcast %76 : vector<2x8x1xf32> to vector<2x8x8xf32>
    %78 = arith.subf %74, %77 : vector<2x8x8xf32>
    %79 = math.exp %78 : vector<2x8x8xf32>
    %cst_30 = arith.constant dense<0.000000e+00> : vector<2x8xf32>
    %80 = vector.multi_reduction <add>, %79, %cst_30 [2] : vector<2x8x8xf32> to vector<2x8xf32>
    %81 = vector.shape_cast %80 : vector<2x8xf32> to vector<2x8x1xf32>
    %82 = tpu.reciprocal %81 {approx = true} : vector<2x8x1xf32> -> vector<2x8x1xf32>
    %83 = vector.broadcast %82 : vector<2x8x1xf32> to vector<2x8x8xf32>
    %84 = arith.mulf %79, %83 : vector<2x8x8xf32>
    %cst_31 = arith.constant dense<0.000000e+00> : vector<2x8xf32>
    %85 = vector.multi_reduction <add>, %84, %cst_31 [1] : vector<2x8x8xf32> to vector<2x8xf32>
    %86 = vector.shape_cast %85 : vector<2x8xf32> to vector<2x1x8xf32>
    %cst_32 = arith.constant 8.000000e+00 : f32
    %87 = vector.broadcast %cst_32 : f32 to vector<2x1x8xf32>
    %88 = arith.divf %86, %87 : vector<2x1x8xf32>
    "tpu.trace_start"() <{level = 10 : i32, message = "bqk,bkd->bqd"}> : () -> ()
    %cst_33 = arith.constant dense<0.000000e+00> : vector<2x1x8xf32>
    %89 = tpu.matmul %88, %73, %cst_33 {dimension_numbers = #tpu.dot_dimension_numbers<[2], [1], [1], [2], [0, 0, 0, 1, 1, 2], [0], [0]>} : vector<2x1x8xf32>, vector<2x8x8xf32>, vector<2x1x8xf32> -> vector<2x1x8xf32>
    "tpu.trace_stop"() : () -> ()
    %90 = vector.shape_cast %89 : vector<2x1x8xf32> to vector<2x8xf32>
    %c0_34 = arith.constant 0 : index
    %c24 = arith.constant 24 : index
    %91 = vector.load %arg7[%c0_34, %c24] : memref<2x32xf32, #tpu.memory_space<vmem>>, vector<2x8xf32>
    tpu.vector_store %arg7[%c0_34, %c24], %90 {strides = array<i32>} : memref<2x32xf32, #tpu.memory_space<vmem>>, vector<2x8xf32>,
    %c0_35 = arith.constant 0 : index
    %c0_36 = arith.constant 0 : index
    %92 = vector.load %arg7[%c0_35, %c0_36] : memref<2x32xf32, #tpu.memory_space<vmem>>, vector<2x32xf32>
    %c0_37 = arith.constant 0 : index
    %c0_38 = arith.constant 0 : index
    %93 = vector.load %arg4[%c0_37, %c0_38] : memref<32x32xf32, #tpu.memory_space<vmem>>, vector<32x32xf32>
    %cst_39 = arith.constant dense<0.000000e+00> : vector<2x32xf32>
    %94 = tpu.matmul %92, %93, %cst_39 {dimension_numbers = #tpu.dot_dimension_numbers<[1], [0], [0], [1], [0, 0, 1, 1], [], []>} : vector<2x32xf32>, vector<32x32xf32>, vector<2x32xf32> -> vector<2x32xf32>
    %c0_40 = arith.constant 0 : index
    %c0_41 = arith.constant 0 : index
    %95 = vector.load %arg5[%c0_40, %c0_41] : memref<1x32xf32, #tpu.memory_space<vmem>>, vector<1x32xf32>
    %96 = vector.broadcast %95 : vector<1x32xf32> to vector<2x32xf32>
    %97 = arith.addf %94, %96 : vector<2x32xf32>
    %cst_42 = arith.constant dense<0xFF800000> : vector<2xf32>
    %98 = vector.multi_reduction <maximumf>, %97, %cst_42 [1] : vector<2x32xf32> to vector<2xf32>
    %99 = vector.shape_cast %98 : vector<2xf32> to vector<2x1xf32>
    %100 = vector.broadcast %99 : vector<2x1xf32> to vector<2x32xf32>
    %101 = arith.subf %97, %100 : vector<2x32xf32>
    %102 = math.exp %101 : vector<2x32xf32>
    %cst_43 = arith.constant dense<0.000000e+00> : vector<2xf32>
    %103 = vector.multi_reduction <add>, %102, %cst_43 [1] : vector<2x32xf32> to vector<2xf32>
    %104 = vector.shape_cast %103 : vector<2xf32> to vector<2x1xf32>
    %105 = tpu.reciprocal %104 {approx = true} : vector<2x1xf32> -> vector<2x1xf32>
    %106 = vector.broadcast %105 : vector<2x1xf32> to vector<2x32xf32>
    %107 = arith.mulf %102, %106 : vector<2x32xf32>
    %c0_44 = arith.constant 0 : index
    %c0_45 = arith.constant 0 : index
    %108 = vector.load %arg6[%c0_44, %c0_45] : memref<2x32xf32, #tpu.memory_space<vmem>>, vector<2x32xf32>
    tpu.vector_store %arg6[%c0_44, %c0_45], %107 {strides = array<i32>} : memref<2x32xf32, #tpu.memory_space<vmem>>, vector<2x32xf32>,
    return
  }
  func.func @transform_0(%arg0: i32) -> (i32, i32, i32) {
    %c0_i32 = arith.constant 0 : i32
    %c0_i32_0 = arith.constant 0 : i32
    %c0_i32_1 = arith.constant 0 : i32
    return %arg0, %c0_i32, %c0_i32_0 : i32, i32, i32
  }
  func.func @transform_1(%arg0: i32) -> (i32, i32) {
    %c0_i32 = arith.constant 0 : i32
    %c0_i32_0 = arith.constant 0 : i32
    %c0_i32_1 = arith.constant 0 : i32
    return %c0_i32, %c0_i32_0 : i32, i32
  }
  func.func @transform_2(%arg0: i32) -> (i32, i32) {
    %c0_i32 = arith.constant 0 : i32
    %c0_i32_0 = arith.constant 0 : i32
    %c0_i32_1 = arith.constant 0 : i32
    return %c0_i32, %c0_i32_0 : i32, i32
  }
  func.func @transform_3(%arg0: i32) -> (i32, i32) {
    %c0_i32 = arith.constant 0 : i32
    %c0_i32_0 = arith.constant 0 : i32
    %c0_i32_1 = arith.constant 0 : i32
    return %c0_i32, %c0_i32_0 : i32, i32
  }
  func.func @transform_4(%arg0: i32) -> (i32, i32) {
    %c0_i32 = arith.constant 0 : i32
    %c0_i32_0 = arith.constant 0 : i32
    %c0_i32_1 = arith.constant 0 : i32
    return %c0_i32, %c0_i32_0 : i32, i32
  }
  func.func @transform_5(%arg0: i32) -> (i32, i32) {
    %c0_i32 = arith.constant 0 : i32
    %c0_i32_0 = arith.constant 0 : i32
    return %arg0, %c0_i32 : i32, i32
  }
}

</mosaic_0001>

<llo_original>
// kernel: tpu_custom_call.1
$region0: #{tpu_custom_call.1}
  #allocation0 [shape = 'u32[]', space=smem, size = 0x4, offset = 0x4, fixed_abs, tag = 'smem constant byte address 0x4 - core index']
  #allocation1 [shape = 'u32[144,128]{1,0:T(1,128)}', space=vmem, size = 0x12000, scoped, tag = 'internal scratch']
  #allocation2 [shape = 'f32[2,32]{1,0:T(2,128)}', space=vmem, size = 0x400, scoped, tag = 'scratch operand']
  %s0 = inlined_call_operand.hbm [shape: f32[2,8,32], index: 0, kind: input, shape index: {}]
  %s1 = inlined_call_operand.hbm [shape: f32[32,96], index: 1, kind: input, shape index: {}]
  %s2 = inlined_call_operand.vmem [shape: f32[1,96], index: 2, kind: input, shape index: {}]
  %s3 = inlined_call_operand.hbm [shape: f32[32,32], index: 3, kind: input, shape index: {}]
  %s4 = inlined_call_operand.vmem [shape: f32[1,32], index: 4, kind: input, shape index: {}]
  %s5 = inlined_call_operand.hbm [shape: f32[2,32], index: 5, kind: output, shape index: {}]
  %s6 = sld [smem:[#allocation0]]
  $region42: #{tpu_custom_call.1} parent=0
    _
  %s8 = ssub.s32 1, %s6
  %s9 = scalar_select 0, %s8, %s6
  $region1: #{tpu_custom_call.1} parent=0
    #allocation3 [shape = 'u8[8192]{0}', space=vmem, size = 0x2000, scoped, tag = 'input window, operand 0, single buffered']
    #allocation4 [shape = 's32[1]{0}', space=sflag, size = 0x4, scoped, tag = 'scoped memory for tpu_custom_call.1']
    #allocation5 [shape = 's32[1]{0}', space=sflag, size = 0x4, scoped, tag = 'scoped memory for tpu_custom_call.1']
    #allocation6 [shape = 'u8[16384]{0}', space=vmem, size = 0x4000, scoped, tag = 'input window, operand 1, single buffered']
    #allocation7 [shape = 's32[1]{0}', space=sflag, size = 0x4, scoped, tag = 'scoped memory for tpu_custom_call.1']
    #allocation8 [shape = 'u8[16384]{0}', space=vmem, size = 0x4000, scoped, tag = 'input window, operand 3, single buffered']
    #allocation9 [shape = 'u8[1024]{0}', space=vmem, size = 0x400, scoped, tag = 'output window, operand 0, single buffered']
    %10 = vsyncpa [#allocation4], 0
    %11 = vsyncpa [#allocation7], 0
    %12 = vsyncpa [#allocation5], 0
    // Predicated region
    $region2: #{tpu_custom_call.1} parent=1 // pred_check
      _
    $region3: #{tpu_custom_call.1} parent=1 // pred_check_branch
      %14 = sbr.rel (0) target = $region5
    $region4: #{tpu_custom_call.1} parent=1 // pred_region
      %s16 = ssub.s32 256, 256
      %17 = vsyncadd [#allocation4], %s16
      %s18 = sshll.u32 [#allocation3], 4
      %s19 = int_to_ptr.vmem [resolvable:$true] %s18
      %24 = dma.hbm_to_vmem [thread:$0]  %s0, 256, %s19, [#allocation4], 128, 128, 8
    $region5: #{tpu_custom_call.1} parent=1 // pred_fallthru
      _
    // Predicated region
    $region6: #{tpu_custom_call.1} parent=1 // pred_check
      _
    $region7: #{tpu_custom_call.1} parent=1 // pred_check_branch
      %26 = sbr.rel (0) target = $region9
    $region8: #{tpu_custom_call.1} parent=1 // pred_region
      %s28 = ssub.s32 512, 512
      %29 = vsyncadd [#allocation7], %s28
      %s30 = sshll.u32 [#allocation6], 4
      %s31 = int_to_ptr.vmem [resolvable:$true] %s30
      %36 = dma.hbm_to_vmem [thread:$0]  %s1, 512, %s31, [#allocation7], 128, 128, 8
    $region9: #{tpu_custom_call.1} parent=1 // pred_fallthru
      _
    // Predicated region
    $region10: #{tpu_custom_call.1} parent=1 // pred_check
      _
    $region11: #{tpu_custom_call.1} parent=1 // pred_check_branch
      %38 = sbr.rel (0) target = $region13
    $region12: #{tpu_custom_call.1} parent=1 // pred_region
      _
    $region13: #{tpu_custom_call.1} parent=1 // pred_fallthru
      _
    // Predicated region
    $region14: #{tpu_custom_call.1} parent=1 // pred_check
      _
    $region15: #{tpu_custom_call.1} parent=1 // pred_check_branch
      %40 = sbr.rel (0) target = $region17
    $region16: #{tpu_custom_call.1} parent=1 // pred_region
      %s42 = ssub.s32 512, 512
      %43 = vsyncadd [#allocation7], %s42
      %s44 = sshll.u32 [#allocation8], 4
      %s45 = int_to_ptr.vmem [resolvable:$true] %s44
      %50 = dma.hbm_to_vmem [thread:$0]  %s3, 512, %s45, [#allocation7], 128, 128, 8
    $region17: #{tpu_custom_call.1} parent=1 // pred_fallthru
      _
    // Predicated region
    $region18: #{tpu_custom_call.1} parent=1 // pred_check
      _
    $region19: #{tpu_custom_call.1} parent=1 // pred_check_branch
      %52 = sbr.rel (0) target = $region21
    $region20: #{tpu_custom_call.1} parent=1 // pred_region
      _
    $region21: #{tpu_custom_call.1} parent=1 // pred_fallthru
      _
    // Predicated region
    $region22: #{tpu_custom_call.1} parent=1 // pred_check
      _
    $region23: #{tpu_custom_call.1} parent=1 // pred_check_branch
      %54 = sbr.rel (0) target = $region25
    $region24: #{tpu_custom_call.1} parent=1 // pred_region
      %55 = dma.done [#allocation4], 256
    $region25: #{tpu_custom_call.1} parent=1 // pred_fallthru
      _
    // Predicated region
    $region26: #{tpu_custom_call.1} parent=1 // pred_check
      _
    $region27: #{tpu_custom_call.1} parent=1 // pred_check_branch
      %57 = sbr.rel (0) target = $region29
    $region28: #{tpu_custom_call.1} parent=1 // pred_region
      %58 = dma.done [#allocation7], 512
    $region29: #{tpu_custom_call.1} parent=1 // pred_fallthru
      _
    // Predicated region
    $region30: #{tpu_custom_call.1} parent=1 // pred_check
      _
    $region31: #{tpu_custom_call.1} parent=1 // pred_check_branch
      %60 = sbr.rel (0) target = $region33
    $region32: #{tpu_custom_call.1} parent=1 // pred_region
      %61 = dma.done [#allocation7], 512
    $region33: #{tpu_custom_call.1} parent=1 // pred_fallthru
      _
    %v62 = vld [vmem:[#allocation3] sm:$0xff]
    %v63 = vld [vmem:[#allocation3 + $0x8] sm:$0xff]
    %v64 = vld [vmem:[#allocation6] sm:$0xff]
    %v65 = vld [vmem:[#allocation6 + $0x8] sm:$0xff]
    %v66 = vld [vmem:[#allocation6 + $0x10] sm:$0xff]
    %v67 = vld [vmem:[#allocation6 + $0x18] sm:$0xff]
    %v68 = vld [vmem:[%s2] sm:$0x1]
    %v70 = vlaneseq
    %v71 = vshrl.u32 %v70, 7
    %v72 = vsub.s32 0, %v71
    %v73 = vrot.slane %v68, %v72
    %vm75 = vcmask 261120
    %v77 = vsel %vm75, %v62, 0
    %v80 = vsel %vm75, %v63, 0
    %82 = vmatprep.subr.mxu0 0.0
    %83 = vmatpush1.msra.mxu0 %v64
    %84 = vmatprep.subr.mxu0 0.0
    %85 = vmatpush1.msra.mxu0 %v65
    %86 = vmatprep.subr.mxu0 0.0
    %87 = vmatpush1.msra.mxu0 %v66
    %88 = vmatprep.subr.mxu0 0.0
    %89 = vmatpush1.msra.mxu0 %v67
    %90 = vmatprep.subr.mxu0 0.0
    %91 = vmatpush1.msra.mxu0 0.0
    %92 = vmatprep.subr.mxu0 0.0
    %93 = vmatpush1.msra.mxu0 0.0
    %94 = vmatprep.subr.mxu0 0.0
    %95 = vmatpush1.msra.mxu0 0.0
    %96 = vmatprep.subr.mxu0 0.0
    %97 = vmatpush1.msra.mxu0 0.0
    %98 = vmatprep.subr.mxu0 0.0
    %99 = vmatpush1.msra.mxu0 0.0
    %100 = vmatprep.subr.mxu0 0.0
    %101 = vmatpush1.msra.mxu0 0.0
    %102 = vmatprep.subr.mxu0 0.0
    %103 = vmatpush1.msra.mxu0 0.0
    %104 = vmatprep.subr.mxu0 0.0
    %105 = vmatpush1.msra.mxu0 0.0
    %106 = vmatprep.subr.mxu0 0.0
    %107 = vmatpush1.msra.mxu0 0.0
    %108 = vmatprep.subr.mxu0 0.0
    %109 = vmatpush1.msra.mxu0 0.0
    %110 = vmatprep.subr.mxu0 0.0
    %111 = vmatpush1.msra.mxu0 0.0
    %112 = vmatprep.subr.mxu0 0.0
    %113 = vmatpush1.msra.mxu0 0.0
    %114 = vmatprep.subr.mxu0 0.0
    %115 = vmatpush1.msra.mxu0 0.0
    %116 = vmatprep.subr.mxu0 0.0
    %117 = vmatpush1.msra.mxu0 0.0
    %118 = vmatprep.subr.mxu0 0.0
    %119 = vmatpush1.msra.mxu0 0.0
    %120 = vmatprep.subr.mxu0 0.0
    %121 = vmatpush1.msra.mxu0 0.0
    %122 = vmatprep.subr.mxu0 0.0
    %123 = vmatpush1.msra.mxu0 0.0
    %124 = vmatprep.subr.mxu0 0.0
    %125 = vmatpush1.msra.mxu0 0.0
    %126 = vmatprep.subr.mxu0 0.0
    %127 = vmatpush1.msra.mxu0 0.0
    %128 = vmatprep.subr.mxu0 0.0
    %129 = vmatpush1.msra.mxu0 0.0
    %130 = vmatprep.subr.mxu0 0.0
    %131 = vmatpush1.msra.mxu0 0.0
    %132 = vmatprep.subr.mxu0 0.0
    %133 = vmatpush1.msra.mxu0 0.0
    %134 = vmatprep.subr.mxu0 0.0
    %135 = vmatpush1.msra.mxu0 0.0
    %136 = vmatprep.subr.mxu0 0.0
    %137 = vmatpush1.msra.mxu0 0.0
    %138 = vmatprep.subr.mxu0 0.0
    %139 = vmatpush1.msra.mxu0 0.0
    %140 = vmatprep.subr.mxu0 0.0
    %141 = vmatpush1.msra.mxu0 0.0
    %142 = vmatprep.subr.mxu0 0.0
    %143 = vmatpush1.msra.mxu0 0.0
    %144 = vmatprep.subr.mxu0 0.0
    %145 = vmatpush1.msra.mxu0 0.0
    %146 = vmatprep.mubr.f32.mxu0 0.0
    %147 = vmatmul.mubr.f32.gmra.mrb[0].mxu0 %v77
    %v148 = vpop.f32.mrb[0].mxu0
    %v149 = vadd.f32 %v73, %v148
    %v150 = vpop.f32.mrb[0].mxu0
    %151 = vmatprep.mubr.f32.mxu0 0.0
    %152 = vmatmul.mubr.f32.gmra.mrb[0].mxu0 %v80
    %v153 = vpop.f32.mrb[0].mxu0
    %v154 = vadd.f32 %v73, %v153
    %v155 = vpop.f32.mrb[0].mxu0
    %156 = vdwg.mxu0
    %158 = vrot.lane.b32.xlu0 %v149, 96
    %v159 = vpop.permute.xlu0 %158
    %vm160 = vcmask 64512
    %v161 = vsel %vm160, %v149, 0
    %v163 = vsel %vm160, %v159, 0
    %165 = vmatprep.subr.mxu0 0.0
    %166 = vmatpush1.xpose.msra.mxu0 %v163
    %167 = vmatprep.subr.mxu0 0.0
    %168 = vmatpush1.xpose.msra.mxu0 0.0
    %169 = vmatprep.subr.mxu0 0.0
    %170 = vmatpush1.xpose.msra.mxu0 0.0
    %171 = vmatprep.subr.mxu0 0.0
    %172 = vmatpush1.xpose.msra.mxu0 0.0
    %173 = vmatprep.subr.mxu0 0.0
    %174 = vmatpush1.xpose.msra.mxu0 0.0
    %175 = vmatprep.subr.mxu0 0.0
    %176 = vmatpush1.xpose.msra.mxu0 0.0
    %177 = vmatprep.subr.mxu0 0.0
    %178 = vmatpush1.xpose.msra.mxu0 0.0
    %179 = vmatprep.subr.mxu0 0.0
    %180 = vmatpush1.xpose.msra.mxu0 0.0
    %181 = vmatprep.subr.mxu0 0.0
    %182 = vmatpush1.xpose.msra.mxu0 0.0
    %183 = vmatprep.subr.mxu0 0.0
    %184 = vmatpush1.xpose.msra.mxu0 0.0
    %185 = vmatprep.subr.mxu0 0.0
    %186 = vmatpush1.xpose.msra.mxu0 0.0
    %187 = vmatprep.subr.mxu0 0.0
    %188 = vmatpush1.xpose.msra.mxu0 0.0
    %189 = vmatprep.subr.mxu0 0.0
    %190 = vmatpush1.xpose.msra.mxu0 0.0
    %191 = vmatprep.subr.mxu0 0.0
    %192 = vmatpush1.xpose.msra.mxu0 0.0
    %193 = vmatprep.subr.mxu0 0.0
    %194 = vmatpush1.xpose.msra.mxu0 0.0
    %195 = vmatprep.subr.mxu0 0.0
    %196 = vmatpush1.xpose.msra.mxu0 0.0
    %197 = vmatprep.subr.mxu0 0.0
    %198 = vmatpush1.xpose.msra.mxu0 0.0
    %199 = vmatprep.subr.mxu0 0.0
    %200 = vmatpush1.xpose.msra.mxu0 0.0
    %201 = vmatprep.subr.mxu0 0.0
    %202 = vmatpush1.xpose.msra.mxu0 0.0
    %203 = vmatprep.subr.mxu0 0.0
    %204 = vmatpush1.xpose.msra.mxu0 0.0
    %205 = vmatprep.subr.mxu0 0.0
    %206 = vmatpush1.xpose.msra.mxu0 0.0
    %207 = vmatprep.subr.mxu0 0.0
    %208 = vmatpush1.xpose.msra.mxu0 0.0
    %209 = vmatprep.subr.mxu0 0.0
    %210 = vmatpush1.xpose.msra.mxu0 0.0
    %211 = vmatprep.subr.mxu0 0.0
    %212 = vmatpush1.xpose.msra.mxu0 0.0
    %213 = vmatprep.subr.mxu0 0.0
    %214 = vmatpush1.xpose.msra.mxu0 0.0
    %215 = vmatprep.subr.mxu0 0.0
    %216 = vmatpush1.xpose.msra.mxu0 0.0
    %217 = vmatprep.subr.mxu0 0.0
    %218 = vmatpush1.xpose.msra.mxu0 0.0
    %219 = vmatprep.subr.mxu0 0.0
    %220 = vmatpush1.xpose.msra.mxu0 0.0
    %221 = vmatprep.subr.mxu0 0.0
    %222 = vmatpush1.xpose.msra.mxu0 0.0
    %223 = vmatprep.subr.mxu0 0.0
    %224 = vmatpush1.xpose.msra.mxu0 0.0
    %225 = vmatprep.subr.mxu0 0.0
    %226 = vmatpush1.xpose.msra.mxu0 0.0
    %227 = vmatprep.subr.mxu0 0.0
    %228 = vmatpush1.xpose.msra.mxu0 0.0
    %229 = vmatprep.mubr.f32.mxu0 0.0
    %230 = vmatmul.mubr.f32.gmra.mrb[0].mxu0 %v161
    %v231 = vpop.f32.mrb[0].mxu0
    %v232 = vadd.f32 0.0, %v231
    %v233 = vpop.f32.mrb[0].mxu0
    %234 = vdwg.mxu0
    %236 = vrot.lane.b32.xlu0 %v154, 96
    %v237 = vpop.permute.xlu0 %236
    %v238 = vsel %vm160, %v154, 0
    %v240 = vsel %vm160, %v237, 0
    %242 = vmatprep.subr.mxu0 0.0
    %243 = vmatpush1.xpose.msra.mxu0 %v240
    %244 = vmatprep.subr.mxu0 0.0
    %245 = vmatpush1.xpose.msra.mxu0 0.0
    %246 = vmatprep.subr.mxu0 0.0
    %247 = vmatpush1.xpose.msra.mxu0 0.0
    %248 = vmatprep.subr.mxu0 0.0
    %249 = vmatpush1.xpose.msra.mxu0 0.0
    %250 = vmatprep.subr.mxu0 0.0
    %251 = vmatpush1.xpose.msra.mxu0 0.0
    %252 = vmatprep.subr.mxu0 0.0
    %253 = vmatpush1.xpose.msra.mxu0 0.0
    %254 = vmatprep.subr.mxu0 0.0
    %255 = vmatpush1.xpose.msra.mxu0 0.0
    %256 = vmatprep.subr.mxu0 0.0
    %257 = vmatpush1.xpose.msra.mxu0 0.0
    %258 = vmatprep.subr.mxu0 0.0
    %259 = vmatpush1.xpose.msra.mxu0 0.0
    %260 = vmatprep.subr.mxu0 0.0
    %261 = vmatpush1.xpose.msra.mxu0 0.0
    %262 = vmatprep.subr.mxu0 0.0
    %263 = vmatpush1.xpose.msra.mxu0 0.0
    %264 = vmatprep.subr.mxu0 0.0
    %265 = vmatpush1.xpose.msra.mxu0 0.0
    %266 = vmatprep.subr.mxu0 0.0
    %267 = vmatpush1.xpose.msra.mxu0 0.0
    %268 = vmatprep.subr.mxu0 0.0
    %269 = vmatpush1.xpose.msra.mxu0 0.0
    %270 = vmatprep.subr.mxu0 0.0
    %271 = vmatpush1.xpose.msra.mxu0 0.0
    %272 = vmatprep.subr.mxu0 0.0
    %273 = vmatpush1.xpose.msra.mxu0 0.0
    %274 = vmatprep.subr.mxu0 0.0
    %275 = vmatpush1.xpose.msra.mxu0 0.0
    %276 = vmatprep.subr.mxu0 0.0
    %277 = vmatpush1.xpose.msra.mxu0 0.0
    %278 = vmatprep.subr.mxu0 0.0
    %279 = vmatpush1.xpose.msra.mxu0 0.0
    %280 = vmatprep.subr.mxu0 0.0
    %281 = vmatpush1.xpose.msra.mxu0 0.0
    %282 = vmatprep.subr.mxu0 0.0
    %283 = vmatpush1.xpose.msra.mxu0 0.0
    %284 = vmatprep.subr.mxu0 0.0
    %285 = vmatpush1.xpose.msra.mxu0 0.0
    %286 = vmatprep.subr.mxu0 0.0
    %287 = vmatpush1.xpose.msra.mxu0 0.0
    %288 = vmatprep.subr.mxu0 0.0
    %289 = vmatpush1.xpose.msra.mxu0 0.0
    %290 = vmatprep.subr.mxu0 0.0
    %291 = vmatpush1.xpose.msra.mxu0 0.0
    %292 = vmatprep.subr.mxu0 0.0
    %293 = vmatpush1.xpose.msra.mxu0 0.0
    %294 = vmatprep.subr.mxu0 0.0
    %295 = vmatpush1.xpose.msra.mxu0 0.0
    %296 = vmatprep.subr.mxu0 0.0
    %297 = vmatpush1.xpose.msra.mxu0 0.0
    %298 = vmatprep.subr.mxu0 0.0
    %299 = vmatpush1.xpose.msra.mxu0 0.0
    %300 = vmatprep.subr.mxu0 0.0
    %301 = vmatpush1.xpose.msra.mxu0 0.0
    %302 = vmatprep.subr.mxu0 0.0
    %303 = vmatpush1.xpose.msra.mxu0 0.0
    %304 = vmatprep.subr.mxu0 0.0
    %305 = vmatpush1.xpose.msra.mxu0 0.0
    %306 = vmatprep.mubr.f32.mxu0 0.0
    %307 = vmatmul.mubr.f32.gmra.mrb[0].mxu0 %v238
    %v308 = vpop.f32.mrb[0].mxu0
    %v309 = vadd.f32 0.0, %v308
    %v310 = vpop.f32.mrb[0].mxu0
    %311 = vdwg.mxu0
    %v312 = vsel %vm160, %v232, -inf
    %313 = vmax.xlane.f32.xlu0 %v312
    %v314 = vpop.xlane.xlu0 %313
    %v315 = vsel %vm160, %v309, -inf
    %316 = vmax.xlane.f32.xlu0 %v315
    %v317 = vpop.xlane.xlu0 %316
    %v318 = vsub.f32 %v232, %v314
    %v319 = vsub.f32 %v309, %v317
    %v320 = vmul.f32 %v318, 1.442695
    %v321 = vpow.pop %v320
    %v322 = vmul.f32 %v319, 1.442695
    %v323 = vpow.pop %v322
    %v324 = vsel %vm160, %v321, 0.0
    %325 = vadd.xlane.f32.xlu0 %v324
    %v326 = vpop.xlane.xlu0 %325
    %v327 = vsel %vm160, %v323, 0.0
    %328 = vadd.xlane.f32.xlu0 %v327
    %v329 = vpop.xlane.xlu0 %328
    %v330 = vrcp.pop %v326
    %v331 = vrcp.pop %v329
    %v332 = vmul.f32 %v321, %v330
    %v333 = vmul.f32 %v323, %v331
    %v334 = vsel %vm160, %v332, 0.0
    %v335 = vrot.slane %v334, 4
    %v336 = vadd.f32 %v334, %v335
    %v337 = vrot.slane %v336, 2
    %v338 = vadd.f32 %v336, %v337
    %v339 = vrot.slane %v338, 1
    %v340 = vadd.f32 %v338, %v339
    %v341 = vsel %vm160, %v333, 0.0
    %v342 = vrot.slane %v341, 4
    %v343 = vadd.f32 %v341, %v342
    %v344 = vrot.slane %v343, 2
    %v345 = vadd.f32 %v343, %v344
    %v346 = vrot.slane %v345, 1
    %v347 = vadd.f32 %v345, %v346
    %v348 = vrcp.pop 8.0
    %v349 = vmul.f32 %v340, %v348
    %v350 = vmul.f32 %v347, %v348
    %351 = vrot.lane.b32.xlu0 %v149, 64
    %v352 = vpop.permute.xlu0 %351
    %v355 = vsel %vm160, %v349, 0
    %357 = vmatprep.subr.mxu0 0.0
    %358 = vmatpush1.msra.mxu0 %v352
    %359 = vmatprep.subr.mxu0 0.0
    %360 = vmatpush1.msra.mxu0 0.0
    %361 = vmatprep.subr.mxu0 0.0
    %362 = vmatpush1.msra.mxu0 0.0
    %363 = vmatprep.subr.mxu0 0.0
    %364 = vmatpush1.msra.mxu0 0.0
    %365 = vmatprep.subr.mxu0 0.0
    %366 = vmatpush1.msra.mxu0 0.0
    %367 = vmatprep.subr.mxu0 0.0
    %368 = vmatpush1.msra.mxu0 0.0
    %369 = vmatprep.subr.mxu0 0.0
    %370 = vmatpush1.msra.mxu0 0.0
    %371 = vmatprep.subr.mxu0 0.0
    %372 = vmatpush1.msra.mxu0 0.0
    %373 = vmatprep.subr.mxu0 0.0
    %374 = vmatpush1.msra.mxu0 0.0
    %375 = vmatprep.subr.mxu0 0.0
    %376 = vmatpush1.msra.mxu0 0.0
    %377 = vmatprep.subr.mxu0 0.0
    %378 = vmatpush1.msra.mxu0 0.0
    %379 = vmatprep.subr.mxu0 0.0
    %380 = vmatpush1.msra.mxu0 0.0
    %381 = vmatprep.subr.mxu0 0.0
    %382 = vmatpush1.msra.mxu0 0.0
    %383 = vmatprep.subr.mxu0 0.0
    %384 = vmatpush1.msra.mxu0 0.0
    %385 = vmatprep.subr.mxu0 0.0
    %386 = vmatpush1.msra.mxu0 0.0
    %387 = vmatprep.subr.mxu0 0.0
    %388 = vmatpush1.msra.mxu0 0.0
    %389 = vmatprep.subr.mxu0 0.0
    %390 = vmatpush1.msra.mxu0 0.0
    %391 = vmatprep.subr.mxu0 0.0
    %392 = vmatpush1.msra.mxu0 0.0
    %393 = vmatprep.subr.mxu0 0.0
    %394 = vmatpush1.msra.mxu0 0.0
    %395 = vmatprep.subr.mxu0 0.0
    %396 = vmatpush1.msra.mxu0 0.0
    %397 = vmatprep.subr.mxu0 0.0
    %398 = vmatpush1.msra.mxu0 0.0
    %399 = vmatprep.subr.mxu0 0.0
    %400 = vmatpush1.msra.mxu0 0.0
    %401 = vmatprep.subr.mxu0 0.0
    %402 = vmatpush1.msra.mxu0 0.0
    %403 = vmatprep.subr.mxu0 0.0
    %404 = vmatpush1.msra.mxu0 0.0
    %405 = vmatprep.subr.mxu0 0.0
    %406 = vmatpush1.msra.mxu0 0.0
    %407 = vmatprep.subr.mxu0 0.0
    %408 = vmatpush1.msra.mxu0 0.0
    %409 = vmatprep.subr.mxu0 0.0
    %410 = vmatpush1.msra.mxu0 0.0
    %411 = vmatprep.subr.mxu0 0.0
    %412 = vmatpush1.msra.mxu0 0.0
    %413 = vmatprep.subr.mxu0 0.0
    %414 = vmatpush1.msra.mxu0 0.0
    %415 = vmatprep.subr.mxu0 0.0
    %416 = vmatpush1.msra.mxu0 0.0
    %417 = vmatprep.subr.mxu0 0.0
    %418 = vmatpush1.msra.mxu0 0.0
    %419 = vmatprep.subr.mxu0 0.0
    %420 = vmatpush1.msra.mxu0 0.0
    %421 = vmatprep.mubr.f32.mxu0 0.0
    %422 = vmatmul.mubr.f32.gmra.mrb[0].mxu0 %v355
    %v423 = vpop.f32.mrb[0].mxu0
    %v424 = vadd.f32 0.0, %v423
    %v425 = vpop.f32.mrb[0].mxu0
    %426 = vdwg.mxu0
    %427 = vrot.lane.b32.xlu0 %v154, 64
    %v428 = vpop.permute.xlu0 %427
    %v431 = vsel %vm160, %v350, 0
    %433 = vmatprep.subr.mxu0 0.0
    %434 = vmatpush1.msra.mxu0 %v428
    %435 = vmatprep.subr.mxu0 0.0
    %436 = vmatpush1.msra.mxu0 0.0
    %437 = vmatprep.subr.mxu0 0.0
    %438 = vmatpush1.msra.mxu0 0.0
    %439 = vmatprep.subr.mxu0 0.0
    %440 = vmatpush1.msra.mxu0 0.0
    %441 = vmatprep.subr.mxu0 0.0
    %442 = vmatpush1.msra.mxu0 0.0
    %443 = vmatprep.subr.mxu0 0.0
    %444 = vmatpush1.msra.mxu0 0.0
    %445 = vmatprep.subr.mxu0 0.0
    %446 = vmatpush1.msra.mxu0 0.0
    %447 = vmatprep.subr.mxu0 0.0
    %448 = vmatpush1.msra.mxu0 0.0
    %449 = vmatprep.subr.mxu0 0.0
    %450 = vmatpush1.msra.mxu0 0.0
    %451 = vmatprep.subr.mxu0 0.0
    %452 = vmatpush1.msra.mxu0 0.0
    %453 = vmatprep.subr.mxu0 0.0
    %454 = vmatpush1.msra.mxu0 0.0
    %455 = vmatprep.subr.mxu0 0.0
    %456 = vmatpush1.msra.mxu0 0.0
    %457 = vmatprep.subr.mxu0 0.0
    %458 = vmatpush1.msra.mxu0 0.0
    %459 = vmatprep.subr.mxu0 0.0
    %460 = vmatpush1.msra.mxu0 0.0
    %461 = vmatprep.subr.mxu0 0.0
    %462 = vmatpush1.msra.mxu0 0.0
    %463 = vmatprep.subr.mxu0 0.0
    %464 = vmatpush1.msra.mxu0 0.0
    %465 = vmatprep.subr.mxu0 0.0
    %466 = vmatpush1.msra.mxu0 0.0
    %467 = vmatprep.subr.mxu0 0.0
    %468 = vmatpush1.msra.mxu0 0.0
    %469 = vmatprep.subr.mxu0 0.0
    %470 = vmatpush1.msra.mxu0 0.0
    %471 = vmatprep.subr.mxu0 0.0
    %472 = vmatpush1.msra.mxu0 0.0
    %473 = vmatprep.subr.mxu0 0.0
    %474 = vmatpush1.msra.mxu0 0.0
    %475 = vmatprep.subr.mxu0 0.0
    %476 = vmatpush1.msra.mxu0 0.0
    %477 = vmatprep.subr.mxu0 0.0
    %478 = vmatpush1.msra.mxu0 0.0
    %479 = vmatprep.subr.mxu0 0.0
    %480 = vmatpush1.msra.mxu0 0.0
    %481 = vmatprep.subr.mxu0 0.0
    %482 = vmatpush1.msra.mxu0 0.0
    %483 = vmatprep.subr.mxu0 0.0
    %484 = vmatpush1.msra.mxu0 0.0
    %485 = vmatprep.subr.mxu0 0.0
    %486 = vmatpush1.msra.mxu0 0.0
    %487 = vmatprep.subr.mxu0 0.0
    %488 = vmatpush1.msra.mxu0 0.0
    %489 = vmatprep.subr.mxu0 0.0
    %490 = vmatpush1.msra.mxu0 0.0
    %491 = vmatprep.subr.mxu0 0.0
    %492 = vmatpush1.msra.mxu0 0.0
    %493 = vmatprep.subr.mxu0 0.0
    %494 = vmatpush1.msra.mxu0 0.0
    %495 = vmatprep.subr.mxu0 0.0
    %496 = vmatpush1.msra.mxu0 0.0
    %497 = vmatprep.mubr.f32.mxu0 0.0
    %498 = vmatmul.mubr.f32.gmra.mrb[0].mxu0 %v431
    %v499 = vpop.f32.mrb[0].mxu0
    %v500 = vadd.f32 0.0, %v499
    %v501 = vpop.f32.mrb[0].mxu0
    %502 = vdwg.mxu0
    %v505 = vrot.slane %v500, 7
    %vm506 = vcmask 1041409
    %v507 = vsel %vm506, %v505, %v424
    %vm509 = vcmask 58368
    %510 = vst.msk [vmem:[#allocation2] sm:$0x3] %vm509, %v507
    %511 = vrot.lane.b32.xlu0 %v149, 120
    %v512 = vpop.permute.xlu0 %511
    %513 = vrot.lane.b32.xlu0 %v149, 88
    %v514 = vpop.permute.xlu0 %513
    %v515 = vsel %vm160, %v512, 0
    %v517 = vsel %vm160, %v514, 0
    %519 = vmatprep.subr.mxu0 0.0
    %520 = vmatpush1.xpose.msra.mxu0 %v517
    %521 = vmatprep.subr.mxu0 0.0
    %522 = vmatpush1.xpose.msra.mxu0 0.0
    %523 = vmatprep.subr.mxu0 0.0
    %524 = vmatpush1.xpose.msra.mxu0 0.0
    %525 = vmatprep.subr.mxu0 0.0
    %526 = vmatpush1.xpose.msra.mxu0 0.0
    %527 = vmatprep.subr.mxu0 0.0
    %528 = vmatpush1.xpose.msra.mxu0 0.0
    %529 = vmatprep.subr.mxu0 0.0
    %530 = vmatpush1.xpose.msra.mxu0 0.0
    %531 = vmatprep.subr.mxu0 0.0
    %532 = vmatpush1.xpose.msra.mxu0 0.0
    %533 = vmatprep.subr.mxu0 0.0
    %534 = vmatpush1.xpose.msra.mxu0 0.0
    %535 = vmatprep.subr.mxu0 0.0
    %536 = vmatpush1.xpose.msra.mxu0 0.0
    %537 = vmatprep.subr.mxu0 0.0
    %538 = vmatpush1.xpose.msra.mxu0 0.0
    %539 = vmatprep.subr.mxu0 0.0
    %540 = vmatpush1.xpose.msra.mxu0 0.0
    %541 = vmatprep.subr.mxu0 0.0
    %542 = vmatpush1.xpose.msra.mxu0 0.0
    %543 = vmatprep.subr.mxu0 0.0
    %544 = vmatpush1.xpose.msra.mxu0 0.0
    %545 = vmatprep.subr.mxu0 0.0
    %546 = vmatpush1.xpose.msra.mxu0 0.0
    %547 = vmatprep.subr.mxu0 0.0
    %548 = vmatpush1.xpose.msra.mxu0 0.0
    %549 = vmatprep.subr.mxu0 0.0
    %550 = vmatpush1.xpose.msra.mxu0 0.0
    %551 = vmatprep.subr.mxu0 0.0
    %552 = vmatpush1.xpose.msra.mxu0 0.0
    %553 = vmatprep.subr.mxu0 0.0
    %554 = vmatpush1.xpose.msra.mxu0 0.0
    %555 = vmatprep.subr.mxu0 0.0
    %556 = vmatpush1.xpose.msra.mxu0 0.0
    %557 = vmatprep.subr.mxu0 0.0
    %558 = vmatpush1.xpose.msra.mxu0 0.0
    %559 = vmatprep.subr.mxu0 0.0
    %560 = vmatpush1.xpose.msra.mxu0 0.0
    %561 = vmatprep.subr.mxu0 0.0
    %562 = vmatpush1.xpose.msra.mxu0 0.0
    %563 = vmatprep.subr.mxu0 0.0
    %564 = vmatpush1.xpose.msra.mxu0 0.0
    %565 = vmatprep.subr.mxu0 0.0
    %566 = vmatpush1.xpose.msra.mxu0 0.0
    %567 = vmatprep.subr.mxu0 0.0
    %568 = vmatpush1.xpose.msra.mxu0 0.0
    %569 = vmatprep.subr.mxu0 0.0
    %570 = vmatpush1.xpose.msra.mxu0 0.0
    %571 = vmatprep.subr.mxu0 0.0
    %572 = vmatpush1.xpose.msra.mxu0 0.0
    %573 = vmatprep.subr.mxu0 0.0
    %574 = vmatpush1.xpose.msra.mxu0 0.0
    %575 = vmatprep.subr.mxu0 0.0
    %576 = vmatpush1.xpose.msra.mxu0 0.0
    %577 = vmatprep.subr.mxu0 0.0
    %578 = vmatpush1.xpose.msra.mxu0 0.0
    %579 = vmatprep.subr.mxu0 0.0
    %580 = vmatpush1.xpose.msra.mxu0 0.0
    %581 = vmatprep.subr.mxu0 0.0
    %582 = vmatpush1.xpose.msra.mxu0 0.0
    %583 = vmatprep.mubr.f32.mxu0 0.0
    %584 = vmatmul.mubr.f32.gmra.mrb[0].mxu0 %v515
    %v585 = vpop.f32.mrb[0].mxu0
    %v586 = vadd.f32 0.0, %v585
    %v587 = vpop.f32.mrb[0].mxu0
    %588 = vdwg.mxu0
    %589 = vrot.lane.b32.xlu0 %v154, 120
    %v590 = vpop.permute.xlu0 %589
    %591 = vrot.lane.b32.xlu0 %v154, 88
    %v592 = vpop.permute.xlu0 %591
    %v593 = vsel %vm160, %v590, 0
    %v595 = vsel %vm160, %v592, 0
    %597 = vmatprep.subr.mxu0 0.0
    %598 = vmatpush1.xpose.msra.mxu0 %v595
    %599 = vmatprep.subr.mxu0 0.0
    %600 = vmatpush1.xpose.msra.mxu0 0.0
    %601 = vmatprep.subr.mxu0 0.0
    %602 = vmatpush1.xpose.msra.mxu0 0.0
    %603 = vmatprep.subr.mxu0 0.0
    %604 = vmatpush1.xpose.msra.mxu0 0.0
    %605 = vmatprep.subr.mxu0 0.0
    %606 = vmatpush1.xpose.msra.mxu0 0.0
    %607 = vmatprep.subr.mxu0 0.0
    %608 = vmatpush1.xpose.msra.mxu0 0.0
    %609 = vmatprep.subr.mxu0 0.0
    %610 = vmatpush1.xpose.msra.mxu0 0.0
    %611 = vmatprep.subr.mxu0 0.0
    %612 = vmatpush1.xpose.msra.mxu0 0.0
    %613 = vmatprep.subr.mxu0 0.0
    %614 = vmatpush1.xpose.msra.mxu0 0.0
    %615 = vmatprep.subr.mxu0 0.0
    %616 = vmatpush1.xpose.msra.mxu0 0.0
    %617 = vmatprep.subr.mxu0 0.0
    %618 = vmatpush1.xpose.msra.mxu0 0.0
    %619 = vmatprep.subr.mxu0 0.0
    %620 = vmatpush1.xpose.msra.mxu0 0.0
    %621 = vmatprep.subr.mxu0 0.0
    %622 = vmatpush1.xpose.msra.mxu0 0.0
    %623 = vmatprep.subr.mxu0 0.0
    %624 = vmatpush1.xpose.msra.mxu0 0.0
    %625 = vmatprep.subr.mxu0 0.0
    %626 = vmatpush1.xpose.msra.mxu0 0.0
    %627 = vmatprep.subr.mxu0 0.0
    %628 = vmatpush1.xpose.msra.mxu0 0.0
    %629 = vmatprep.subr.mxu0 0.0
    %630 = vmatpush1.xpose.msra.mxu0 0.0
    %631 = vmatprep.subr.mxu0 0.0
    %632 = vmatpush1.xpose.msra.mxu0 0.0
    %633 = vmatprep.subr.mxu0 0.0
    %634 = vmatpush1.xpose.msra.mxu0 0.0
    %635 = vmatprep.subr.mxu0 0.0
    %636 = vmatpush1.xpose.msra.mxu0 0.0
    %637 = vmatprep.subr.mxu0 0.0
    %638 = vmatpush1.xpose.msra.mxu0 0.0
    %639 = vmatprep.subr.mxu0 0.0
    %640 = vmatpush1.xpose.msra.mxu0 0.0
    %641 = vmatprep.subr.mxu0 0.0
    %642 = vmatpush1.xpose.msra.mxu0 0.0
    %643 = vmatprep.subr.mxu0 0.0
    %644 = vmatpush1.xpose.msra.mxu0 0.0
    %645 = vmatprep.subr.mxu0 0.0
    %646 = vmatpush1.xpose.msra.mxu0 0.0
    %647 = vmatprep.subr.mxu0 0.0
    %648 = vmatpush1.xpose.msra.mxu0 0.0
    %649 = vmatprep.subr.mxu0 0.0
    %650 = vmatpush1.xpose.msra.mxu0 0.0
    %651 = vmatprep.subr.mxu0 0.0
    %652 = vmatpush1.xpose.msra.mxu0 0.0
    %653 = vmatprep.subr.mxu0 0.0
    %654 = vmatpush1.xpose.msra.mxu0 0.0
    %655 = vmatprep.subr.mxu0 0.0
    %656 = vmatpush1.xpose.msra.mxu0 0.0
    %657 = vmatprep.subr.mxu0 0.0
    %658 = vmatpush1.xpose.msra.mxu0 0.0
    %659 = vmatprep.subr.mxu0 0.0
    %660 = vmatpush1.xpose.msra.mxu0 0.0
    %661 = vmatprep.mubr.f32.mxu0 0.0
    %662 = vmatmul.mubr.f32.gmra.mrb[0].mxu0 %v593
    %v663 = vpop.f32.mrb[0].mxu0
    %v664 = vadd.f32 0.0, %v663
    %v665 = vpop.f32.mrb[0].mxu0
    %666 = vdwg.mxu0
    %v667 = vsel %vm160, %v586, -inf
    %668 = vmax.xlane.f32.xlu0 %v667
    %v669 = vpop.xlane.xlu0 %668
    %v670 = vsel %vm160, %v664, -inf
    %671 = vmax.xlane.f32.xlu0 %v670
    %v672 = vpop.xlane.xlu0 %671
    %v673 = vsub.f32 %v586, %v669
    %v674 = vsub.f32 %v664, %v672
    %v675 = vmul.f32 %v673, 1.442695
    %v676 = vpow.pop %v675
    %v677 = vmul.f32 %v674, 1.442695
    %v678 = vpow.pop %v677
    %v679 = vsel %vm160, %v676, 0.0
    %680 = vadd.xlane.f32.xlu0 %v679
    %v681 = vpop.xlane.xlu0 %680
    %v682 = vsel %vm160, %v678, 0.0
    %683 = vadd.xlane.f32.xlu0 %v682
    %v684 = vpop.xlane.xlu0 %683
    %v685 = vrcp.pop %v681
    %v686 = vrcp.pop %v684
    %v687 = vmul.f32 %v676, %v685
    %v688 = vmul.f32 %v678, %v686
    %v689 = vsel %vm160, %v687, 0.0
    %v690 = vrot.slane %v689, 4
    %v691 = vadd.f32 %v689, %v690
    %v692 = vrot.slane %v691, 2
    %v693 = vadd.f32 %v691, %v692
    %v694 = vrot.slane %v693, 1
    %v695 = vadd.f32 %v693, %v694
    %v696 = vsel %vm160, %v688, 0.0
    %v697 = vrot.slane %v696, 4
    %v698 = vadd.f32 %v696, %v697
    %v699 = vrot.slane %v698, 2
    %v700 = vadd.f32 %v698, %v699
    %v701 = vrot.slane %v700, 1
    %v702 = vadd.f32 %v700, %v701
    %v703 = vmul.f32 %v695, %v348
    %v704 = vmul.f32 %v702, %v348
    %705 = vrot.lane.b32.xlu0 %v149, 56
    %v706 = vpop.permute.xlu0 %705
    %v709 = vsel %vm160, %v703, 0
    %711 = vmatprep.subr.mxu0 0.0
    %712 = vmatpush1.msra.mxu0 %v706
    %713 = vmatprep.subr.mxu0 0.0
    %714 = vmatpush1.msra.mxu0 0.0
    %715 = vmatprep.subr.mxu0 0.0
    %716 = vmatpush1.msra.mxu0 0.0
    %717 = vmatprep.subr.mxu0 0.0
    %718 = vmatpush1.msra.mxu0 0.0
    %719 = vmatprep.subr.mxu0 0.0
    %720 = vmatpush1.msra.mxu0 0.0
    %721 = vmatprep.subr.mxu0 0.0
    %722 = vmatpush1.msra.mxu0 0.0
    %723 = vmatprep.subr.mxu0 0.0
    %724 = vmatpush1.msra.mxu0 0.0
    %725 = vmatprep.subr.mxu0 0.0
    %726 = vmatpush1.msra.mxu0 0.0
    %727 = vmatprep.subr.mxu0 0.0
    %728 = vmatpush1.msra.mxu0 0.0
    %729 = vmatprep.subr.mxu0 0.0
    %730 = vmatpush1.msra.mxu0 0.0
    %731 = vmatprep.subr.mxu0 0.0
    %732 = vmatpush1.msra.mxu0 0.0
    %733 = vmatprep.subr.mxu0 0.0
    %734 = vmatpush1.msra.mxu0 0.0
    %735 = vmatprep.subr.mxu0 0.0
    %736 = vmatpush1.msra.mxu0 0.0
    %737 = vmatprep.subr.mxu0 0.0
    %738 = vmatpush1.msra.mxu0 0.0
    %739 = vmatprep.subr.mxu0 0.0
    %740 = vmatpush1.msra.mxu0 0.0
    %741 = vmatprep.subr.mxu0 0.0
    %742 = vmatpush1.msra.mxu0 0.0
    %743 = vmatprep.subr.mxu0 0.0
    %744 = vmatpush1.msra.mxu0 0.0
    %745 = vmatprep.subr.mxu0 0.0
    %746 = vmatpush1.msra.mxu0 0.0
    %747 = vmatprep.subr.mxu0 0.0
    %748 = vmatpush1.msra.mxu0 0.0
    %749 = vmatprep.subr.mxu0 0.0
    %750 = vmatpush1.msra.mxu0 0.0
    %751 = vmatprep.subr.mxu0 0.0
    %752 = vmatpush1.msra.mxu0 0.0
    %753 = vmatprep.subr.mxu0 0.0
    %754 = vmatpush1.msra.mxu0 0.0
    %755 = vmatprep.subr.mxu0 0.0
    %756 = vmatpush1.msra.mxu0 0.0
    %757 = vmatprep.subr.mxu0 0.0
    %758 = vmatpush1.msra.mxu0 0.0
    %759 = vmatprep.subr.mxu0 0.0
    %760 = vmatpush1.msra.mxu0 0.0
    %761 = vmatprep.subr.mxu0 0.0
    %762 = vmatpush1.msra.mxu0 0.0
    %763 = vmatprep.subr.mxu0 0.0
    %764 = vmatpush1.msra.mxu0 0.0
    %765 = vmatprep.subr.mxu0 0.0
    %766 = vmatpush1.msra.mxu0 0.0
    %767 = vmatprep.subr.mxu0 0.0
    %768 = vmatpush1.msra.mxu0 0.0
    %769 = vmatprep.subr.mxu0 0.0
    %770 = vmatpush1.msra.mxu0 0.0
    %771 = vmatprep.subr.mxu0 0.0
    %772 = vmatpush1.msra.mxu0 0.0
    %773 = vmatprep.subr.mxu0 0.0
    %774 = vmatpush1.msra.mxu0 0.0
    %775 = vmatprep.mubr.f32.mxu0 0.0
    %776 = vmatmul.mubr.f32.gmra.mrb[0].mxu0 %v709
    %v777 = vpop.f32.mrb[0].mxu0
    %v778 = vadd.f32 0.0, %v777
    %v779 = vpop.f32.mrb[0].mxu0
    %780 = vdwg.mxu0
    %781 = vrot.lane.b32.xlu0 %v154, 56
    %v782 = vpop.permute.xlu0 %781
    %v785 = vsel %vm160, %v704, 0
    %787 = vmatprep.subr.mxu0 0.0
    %788 = vmatpush1.msra.mxu0 %v782
    %789 = vmatprep.subr.mxu0 0.0
    %790 = vmatpush1.msra.mxu0 0.0
    %791 = vmatprep.subr.mxu0 0.0
    %792 = vmatpush1.msra.mxu0 0.0
    %793 = vmatprep.subr.mxu0 0.0
    %794 = vmatpush1.msra.mxu0 0.0
    %795 = vmatprep.subr.mxu0 0.0
    %796 = vmatpush1.msra.mxu0 0.0
    %797 = vmatprep.subr.mxu0 0.0
    %798 = vmatpush1.msra.mxu0 0.0
    %799 = vmatprep.subr.mxu0 0.0
    %800 = vmatpush1.msra.mxu0 0.0
    %801 = vmatprep.subr.mxu0 0.0
    %802 = vmatpush1.msra.mxu0 0.0
    %803 = vmatprep.subr.mxu0 0.0
    %804 = vmatpush1.msra.mxu0 0.0
    %805 = vmatprep.subr.mxu0 0.0
    %806 = vmatpush1.msra.mxu0 0.0
    %807 = vmatprep.subr.mxu0 0.0
    %808 = vmatpush1.msra.mxu0 0.0
    %809 = vmatprep.subr.mxu0 0.0
    %810 = vmatpush1.msra.mxu0 0.0
    %811 = vmatprep.subr.mxu0 0.0
    %812 = vmatpush1.msra.mxu0 0.0
    %813 = vmatprep.subr.mxu0 0.0
    %814 = vmatpush1.msra.mxu0 0.0
    %815 = vmatprep.subr.mxu0 0.0
    %816 = vmatpush1.msra.mxu0 0.0
    %817 = vmatprep.subr.mxu0 0.0
    %818 = vmatpush1.msra.mxu0 0.0
    %819 = vmatprep.subr.mxu0 0.0
    %820 = vmatpush1.msra.mxu0 0.0
    %821 = vmatprep.subr.mxu0 0.0
    %822 = vmatpush1.msra.mxu0 0.0
    %823 = vmatprep.subr.mxu0 0.0
    %824 = vmatpush1.msra.mxu0 0.0
    %825 = vmatprep.subr.mxu0 0.0
    %826 = vmatpush1.msra.mxu0 0.0
    %827 = vmatprep.subr.mxu0 0.0
    %828 = vmatpush1.msra.mxu0 0.0
    %829 = vmatprep.subr.mxu0 0.0
    %830 = vmatpush1.msra.mxu0 0.0
    %831 = vmatprep.subr.mxu0 0.0
    %832 = vmatpush1.msra.mxu0 0.0
    %833 = vmatprep.subr.mxu0 0.0
    %834 = vmatpush1.msra.mxu0 0.0
    %835 = vmatprep.subr.mxu0 0.0
    %836 = vmatpush1.msra.mxu0 0.0
    %837 = vmatprep.subr.mxu0 0.0
    %838 = vmatpush1.msra.mxu0 0.0
    %839 = vmatprep.subr.mxu0 0.0
    %840 = vmatpush1.msra.mxu0 0.0
    %841 = vmatprep.subr.mxu0 0.0
    %842 = vmatpush1.msra.mxu0 0.0
    %843 = vmatprep.subr.mxu0 0.0
    %844 = vmatpush1.msra.mxu0 0.0
    %845 = vmatprep.subr.mxu0 0.0
    %846 = vmatpush1.msra.mxu0 0.0
    %847 = vmatprep.subr.mxu0 0.0
    %848 = vmatpush1.msra.mxu0 0.0
    %849 = vmatprep.subr.mxu0 0.0
    %850 = vmatpush1.msra.mxu0 0.0
    %851 = vmatprep.mubr.f32.mxu0 0.0
    %852 = vmatmul.mubr.f32.gmra.mrb[0].mxu0 %v785
    %v853 = vpop.f32.mrb[0].mxu0
    %v854 = vadd.f32 0.0, %v853
    %v855 = vpop.f32.mrb[0].mxu0
    %856 = vdwg.mxu0
    %v859 = vrot.slane %v854, 7
    %v860 = vsel %vm506, %v859, %v778
    %861 = vrot.lane.b32.xlu0 %v860, 8
    %v862 = vpop.permute.xlu0 %861
    %vm864 = vcmask 123968
    %865 = vst.msk [vmem:[#allocation2] sm:$0x3] %vm864, %v862
    %866 = vrot.lane.b32.xlu0 %v149, 112
    %v867 = vpop.permute.xlu0 %866
    %868 = vrot.lane.b32.xlu0 %v149, 80
    %v869 = vpop.permute.xlu0 %868
    %v870 = vsel %vm160, %v867, 0
    %v872 = vsel %vm160, %v869, 0
    %874 = vmatprep.subr.mxu0 0.0
    %875 = vmatpush1.xpose.msra.mxu0 %v872
    %876 = vmatprep.subr.mxu0 0.0
    %877 = vmatpush1.xpose.msra.mxu0 0.0
    %878 = vmatprep.subr.mxu0 0.0
    %879 = vmatpush1.xpose.msra.mxu0 0.0
    %880 = vmatprep.subr.mxu0 0.0
    %881 = vmatpush1.xpose.msra.mxu0 0.0
    %882 = vmatprep.subr.mxu0 0.0
    %883 = vmatpush1.xpose.msra.mxu0 0.0
    %884 = vmatprep.subr.mxu0 0.0
    %885 = vmatpush1.xpose.msra.mxu0 0.0
    %886 = vmatprep.subr.mxu0 0.0
    %887 = vmatpush1.xpose.msra.mxu0 0.0
    %888 = vmatprep.subr.mxu0 0.0
    %889 = vmatpush1.xpose.msra.mxu0 0.0
    %890 = vmatprep.subr.mxu0 0.0
    %891 = vmatpush1.xpose.msra.mxu0 0.0
    %892 = vmatprep.subr.mxu0 0.0
    %893 = vmatpush1.xpose.msra.mxu0 0.0
    %894 = vmatprep.subr.mxu0 0.0
    %895 = vmatpush1.xpose.msra.mxu0 0.0
    %896 = vmatprep.subr.mxu0 0.0
    %897 = vmatpush1.xpose.msra.mxu0 0.0
    %898 = vmatprep.subr.mxu0 0.0
    %899 = vmatpush1.xpose.msra.mxu0 0.0
    %900 = vmatprep.subr.mxu0 0.0
    %901 = vmatpush1.xpose.msra.mxu0 0.0
    %902 = vmatprep.subr.mxu0 0.0
    %903 = vmatpush1.xpose.msra.mxu0 0.0
    %904 = vmatprep.subr.mxu0 0.0
    %905 = vmatpush1.xpose.msra.mxu0 0.0
    %906 = vmatprep.subr.mxu0 0.0
    %907 = vmatpush1.xpose.msra.mxu0 0.0
    %908 = vmatprep.subr.mxu0 0.0
    %909 = vmatpush1.xpose.msra.mxu0 0.0
    %910 = vmatprep.subr.mxu0 0.0
    %911 = vmatpush1.xpose.msra.mxu0 0.0
    %912 = vmatprep.subr.mxu0 0.0
    %913 = vmatpush1.xpose.msra.mxu0 0.0
    %914 = vmatprep.subr.mxu0 0.0
    %915 = vmatpush1.xpose.msra.mxu0 0.0
    %916 = vmatprep.subr.mxu0 0.0
    %917 = vmatpush1.xpose.msra.mxu0 0.0
    %918 = vmatprep.subr.mxu0 0.0
    %919 = vmatpush1.xpose.msra.mxu0 0.0
    %920 = vmatprep.subr.mxu0 0.0
    %921 = vmatpush1.xpose.msra.mxu0 0.0
    %922 = vmatprep.subr.mxu0 0.0
    %923 = vmatpush1.xpose.msra.mxu0 0.0
    %924 = vmatprep.subr.mxu0 0.0
    %925 = vmatpush1.xpose.msra.mxu0 0.0
    %926 = vmatprep.subr.mxu0 0.0
    %927 = vmatpush1.xpose.msra.mxu0 0.0
    %928 = vmatprep.subr.mxu0 0.0
    %929 = vmatpush1.xpose.msra.mxu0 0.0
    %930 = vmatprep.subr.mxu0 0.0
    %931 = vmatpush1.xpose.msra.mxu0 0.0
    %932 = vmatprep.subr.mxu0 0.0
    %933 = vmatpush1.xpose.msra.mxu0 0.0
    %934 = vmatprep.subr.mxu0 0.0
    %935 = vmatpush1.xpose.msra.mxu0 0.0
    %936 = vmatprep.subr.mxu0 0.0
    %937 = vmatpush1.xpose.msra.mxu0 0.0
    %938 = vmatprep.mubr.f32.mxu0 0.0
    %939 = vmatmul.mubr.f32.gmra.mrb[0].mxu0 %v870
    %v940 = vpop.f32.mrb[0].mxu0
    %v941 = vadd.f32 0.0, %v940
    %v942 = vpop.f32.mrb[0].mxu0
    %943 = vdwg.mxu0
    %944 = vrot.lane.b32.xlu0 %v154, 112
    %v945 = vpop.permute.xlu0 %944
    %946 = vrot.lane.b32.xlu0 %v154, 80
    %v947 = vpop.permute.xlu0 %946
    %v948 = vsel %vm160, %v945, 0
    %v950 = vsel %vm160, %v947, 0
    %952 = vmatprep.subr.mxu0 0.0
    %953 = vmatpush1.xpose.msra.mxu0 %v950
    %954 = vmatprep.subr.mxu0 0.0
    %955 = vmatpush1.xpose.msra.mxu0 0.0
    %956 = vmatprep.subr.mxu0 0.0
    %957 = vmatpush1.xpose.msra.mxu0 0.0
    %958 = vmatprep.subr.mxu0 0.0
    %959 = vmatpush1.xpose.msra.mxu0 0.0
    %960 = vmatprep.subr.mxu0 0.0
    %961 = vmatpush1.xpose.msra.mxu0 0.0
    %962 = vmatprep.subr.mxu0 0.0
    %963 = vmatpush1.xpose.msra.mxu0 0.0
    %964 = vmatprep.subr.mxu0 0.0
    %965 = vmatpush1.xpose.msra.mxu0 0.0
    %966 = vmatprep.subr.mxu0 0.0
    %967 = vmatpush1.xpose.msra.mxu0 0.0
    %968 = vmatprep.subr.mxu0 0.0
    %969 = vmatpush1.xpose.msra.mxu0 0.0
    %970 = vmatprep.subr.mxu0 0.0
    %971 = vmatpush1.xpose.msra.mxu0 0.0
    %972 = vmatprep.subr.mxu0 0.0
    %973 = vmatpush1.xpose.msra.mxu0 0.0
    %974 = vmatprep.subr.mxu0 0.0
    %975 = vmatpush1.xpose.msra.mxu0 0.0
    %976 = vmatprep.subr.mxu0 0.0
    %977 = vmatpush1.xpose.msra.mxu0 0.0
    %978 = vmatprep.subr.mxu0 0.0
    %979 = vmatpush1.xpose.msra.mxu0 0.0
    %980 = vmatprep.subr.mxu0 0.0
    %981 = vmatpush1.xpose.msra.mxu0 0.0
    %982 = vmatprep.subr.mxu0 0.0
    %983 = vmatpush1.xpose.msra.mxu0 0.0
    %984 = vmatprep.subr.mxu0 0.0
    %985 = vmatpush1.xpose.msra.mxu0 0.0
    %986 = vmatprep.subr.mxu0 0.0
    %987 = vmatpush1.xpose.msra.mxu0 0.0
    %988 = vmatprep.subr.mxu0 0.0
    %989 = vmatpush1.xpose.msra.mxu0 0.0
    %990 = vmatprep.subr.mxu0 0.0
    %991 = vmatpush1.xpose.msra.mxu0 0.0
    %992 = vmatprep.subr.mxu0 0.0
    %993 = vmatpush1.xpose.msra.mxu0 0.0
    %994 = vmatprep.subr.mxu0 0.0
    %995 = vmatpush1.xpose.msra.mxu0 0.0
    %996 = vmatprep.subr.mxu0 0.0
    %997 = vmatpush1.xpose.msra.mxu0 0.0
    %998 = vmatprep.subr.mxu0 0.0
    %999 = vmatpush1.xpose.msra.mxu0 0.0
    %1000 = vmatprep.subr.mxu0 0.0
    %1001 = vmatpush1.xpose.msra.mxu0 0.0
    %1002 = vmatprep.subr.mxu0 0.0
    %1003 = vmatpush1.xpose.msra.mxu0 0.0
    %1004 = vmatprep.subr.mxu0 0.0
    %1005 = vmatpush1.xpose.msra.mxu0 0.0
    %1006 = vmatprep.subr.mxu0 0.0
    %1007 = vmatpush1.xpose.msra.mxu0 0.0
    %1008 = vmatprep.subr.mxu0 0.0
    %1009 = vmatpush1.xpose.msra.mxu0 0.0
    %1010 = vmatprep.subr.mxu0 0.0
    %1011 = vmatpush1.xpose.msra.mxu0 0.0
    %1012 = vmatprep.subr.mxu0 0.0
    %1013 = vmatpush1.xpose.msra.mxu0 0.0
    %1014 = vmatprep.subr.mxu0 0.0
    %1015 = vmatpush1.xpose.msra.mxu0 0.0
    %1016 = vmatprep.mubr.f32.mxu0 0.0
    %1017 = vmatmul.mubr.f32.gmra.mrb[0].mxu0 %v948
    %v1018 = vpop.f32.mrb[0].mxu0
    %v1019 = vadd.f32 0.0, %v1018
    %v1020 = vpop.f32.mrb[0].mxu0
    %1021 = vdwg.mxu0
    %v1022 = vsel %vm160, %v941, -inf
    %1023 = vmax.xlane.f32.xlu0 %v1022
    %v1024 = vpop.xlane.xlu0 %1023
    %v1025 = vsel %vm160, %v1019, -inf
    %1026 = vmax.xlane.f32.xlu0 %v1025
    %v1027 = vpop.xlane.xlu0 %1026
    %v1028 = vsub.f32 %v941, %v1024
    %v1029 = vsub.f32 %v1019, %v1027
    %v1030 = vmul.f32 %v1028, 1.442695
    %v1031 = vpow.pop %v1030
    %v1032 = vmul.f32 %v1029, 1.442695
    %v1033 = vpow.pop %v1032
    %v1034 = vsel %vm160, %v1031, 0.0
    %1035 = vadd.xlane.f32.xlu0 %v1034
    %v1036 = vpop.xlane.xlu0 %1035
    %v1037 = vsel %vm160, %v1033, 0.0
    %1038 = vadd.xlane.f32.xlu0 %v1037
    %v1039 = vpop.xlane.xlu0 %1038
    %v1040 = vrcp.pop %v1036
    %v1041 = vrcp.pop %v1039
    %v1042 = vmul.f32 %v1031, %v1040
    %v1043 = vmul.f32 %v1033, %v1041
    %v1044 = vsel %vm160, %v1042, 0.0
    %v1045 = vrot.slane %v1044, 4
    %v1046 = vadd.f32 %v1044, %v1045
    %v1047 = vrot.slane %v1046, 2
    %v1048 = vadd.f32 %v1046, %v1047
    %v1049 = vrot.slane %v1048, 1
    %v1050 = vadd.f32 %v1048, %v1049
    %v1051 = vsel %vm160, %v1043, 0.0
    %v1052 = vrot.slane %v1051, 4
    %v1053 = vadd.f32 %v1051, %v1052
    %v1054 = vrot.slane %v1053, 2
    %v1055 = vadd.f32 %v1053, %v1054
    %v1056 = vrot.slane %v1055, 1
    %v1057 = vadd.f32 %v1055, %v1056
    %v1058 = vmul.f32 %v1050, %v348
    %v1059 = vmul.f32 %v1057, %v348
    %1060 = vrot.lane.b32.xlu0 %v149, 48
    %v1061 = vpop.permute.xlu0 %1060
    %v1064 = vsel %vm160, %v1058, 0
    %1066 = vmatprep.subr.mxu0 0.0
    %1067 = vmatpush1.msra.mxu0 %v1061
    %1068 = vmatprep.subr.mxu0 0.0
    %1069 = vmatpush1.msra.mxu0 0.0
    %1070 = vmatprep.subr.mxu0 0.0
    %1071 = vmatpush1.msra.mxu0 0.0
    %1072 = vmatprep.subr.mxu0 0.0
    %1073 = vmatpush1.msra.mxu0 0.0
    %1074 = vmatprep.subr.mxu0 0.0
    %1075 = vmatpush1.msra.mxu0 0.0
    %1076 = vmatprep.subr.mxu0 0.0
    %1077 = vmatpush1.msra.mxu0 0.0
    %1078 = vmatprep.subr.mxu0 0.0
    %1079 = vmatpush1.msra.mxu0 0.0
    %1080 = vmatprep.subr.mxu0 0.0
    %1081 = vmatpush1.msra.mxu0 0.0
    %1082 = vmatprep.subr.mxu0 0.0
    %1083 = vmatpush1.msra.mxu0 0.0
    %1084 = vmatprep.subr.mxu0 0.0
    %1085 = vmatpush1.msra.mxu0 0.0
    %1086 = vmatprep.subr.mxu0 0.0
    %1087 = vmatpush1.msra.mxu0 0.0
    %1088 = vmatprep.subr.mxu0 0.0
    %1089 = vmatpush1.msra.mxu0 0.0
    %1090 = vmatprep.subr.mxu0 0.0
    %1091 = vmatpush1.msra.mxu0 0.0
    %1092 = vmatprep.subr.mxu0 0.0
    %1093 = vmatpush1.msra.mxu0 0.0
    %1094 = vmatprep.subr.mxu0 0.0
    %1095 = vmatpush1.msra.mxu0 0.0
    %1096 = vmatprep.subr.mxu0 0.0
    %1097 = vmatpush1.msra.mxu0 0.0
    %1098 = vmatprep.subr.mxu0 0.0
    %1099 = vmatpush1.msra.mxu0 0.0
    %1100 = vmatprep.subr.mxu0 0.0
    %1101 = vmatpush1.msra.mxu0 0.0
    %1102 = vmatprep.subr.mxu0 0.0
    %1103 = vmatpush1.msra.mxu0 0.0
    %1104 = vmatprep.subr.mxu0 0.0
    %1105 = vmatpush1.msra.mxu0 0.0
    %1106 = vmatprep.subr.mxu0 0.0
    %1107 = vmatpush1.msra.mxu0 0.0
    %1108 = vmatprep.subr.mxu0 0.0
    %1109 = vmatpush1.msra.mxu0 0.0
    %1110 = vmatprep.subr.mxu0 0.0
    %1111 = vmatpush1.msra.mxu0 0.0
    %1112 = vmatprep.subr.mxu0 0.0
    %1113 = vmatpush1.msra.mxu0 0.0
    %1114 = vmatprep.subr.mxu0 0.0
    %1115 = vmatpush1.msra.mxu0 0.0
    %1116 = vmatprep.subr.mxu0 0.0
    %1117 = vmatpush1.msra.mxu0 0.0
    %1118 = vmatprep.subr.mxu0 0.0
    %1119 = vmatpush1.msra.mxu0 0.0
    %1120 = vmatprep.subr.mxu0 0.0
    %1121 = vmatpush1.msra.mxu0 0.0
    %1122 = vmatprep.subr.mxu0 0.0
    %1123 = vmatpush1.msra.mxu0 0.0
    %1124 = vmatprep.subr.mxu0 0.0
    %1125 = vmatpush1.msra.mxu0 0.0
    %1126 = vmatprep.subr.mxu0 0.0
    %1127 = vmatpush1.msra.mxu0 0.0
    %1128 = vmatprep.subr.mxu0 0.0
    %1129 = vmatpush1.msra.mxu0 0.0
    %1130 = vmatprep.mubr.f32.mxu0 0.0
    %1131 = vmatmul.mubr.f32.gmra.mrb[0].mxu0 %v1064
    %v1132 = vpop.f32.mrb[0].mxu0
    %v1133 = vadd.f32 0.0, %v1132
    %v1134 = vpop.f32.mrb[0].mxu0
    %1135 = vdwg.mxu0
    %1136 = vrot.lane.b32.xlu0 %v154, 48
    %v1137 = vpop.permute.xlu0 %1136
    %v1140 = vsel %vm160, %v1059, 0
    %1142 = vmatprep.subr.mxu0 0.0
    %1143 = vmatpush1.msra.mxu0 %v1137
    %1144 = vmatprep.subr.mxu0 0.0
    %1145 = vmatpush1.msra.mxu0 0.0
    %1146 = vmatprep.subr.mxu0 0.0
    %1147 = vmatpush1.msra.mxu0 0.0
    %1148 = vmatprep.subr.mxu0 0.0
    %1149 = vmatpush1.msra.mxu0 0.0
    %1150 = vmatprep.subr.mxu0 0.0
    %1151 = vmatpush1.msra.mxu0 0.0
    %1152 = vmatprep.subr.mxu0 0.0
    %1153 = vmatpush1.msra.mxu0 0.0
    %1154 = vmatprep.subr.mxu0 0.0
    %1155 = vmatpush1.msra.mxu0 0.0
    %1156 = vmatprep.subr.mxu0 0.0
    %1157 = vmatpush1.msra.mxu0 0.0
    %1158 = vmatprep.subr.mxu0 0.0
    %1159 = vmatpush1.msra.mxu0 0.0
    %1160 = vmatprep.subr.mxu0 0.0
    %1161 = vmatpush1.msra.mxu0 0.0
    %1162 = vmatprep.subr.mxu0 0.0
    %1163 = vmatpush1.msra.mxu0 0.0
    %1164 = vmatprep.subr.mxu0 0.0
    %1165 = vmatpush1.msra.mxu0 0.0
    %1166 = vmatprep.subr.mxu0 0.0
    %1167 = vmatpush1.msra.mxu0 0.0
    %1168 = vmatprep.subr.mxu0 0.0
    %1169 = vmatpush1.msra.mxu0 0.0
    %1170 = vmatprep.subr.mxu0 0.0
    %1171 = vmatpush1.msra.mxu0 0.0
    %1172 = vmatprep.subr.mxu0 0.0
    %1173 = vmatpush1.msra.mxu0 0.0
    %1174 = vmatprep.subr.mxu0 0.0
    %1175 = vmatpush1.msra.mxu0 0.0
    %1176 = vmatprep.subr.mxu0 0.0
    %1177 = vmatpush1.msra.mxu0 0.0
    %1178 = vmatprep.subr.mxu0 0.0
    %1179 = vmatpush1.msra.mxu0 0.0
    %1180 = vmatprep.subr.mxu0 0.0
    %1181 = vmatpush1.msra.mxu0 0.0
    %1182 = vmatprep.subr.mxu0 0.0
    %1183 = vmatpush1.msra.mxu0 0.0
    %1184 = vmatprep.subr.mxu0 0.0
    %1185 = vmatpush1.msra.mxu0 0.0
    %1186 = vmatprep.subr.mxu0 0.0
    %1187 = vmatpush1.msra.mxu0 0.0
    %1188 = vmatprep.subr.mxu0 0.0
    %1189 = vmatpush1.msra.mxu0 0.0
    %1190 = vmatprep.subr.mxu0 0.0
    %1191 = vmatpush1.msra.mxu0 0.0
    %1192 = vmatprep.subr.mxu0 0.0
    %1193 = vmatpush1.msra.mxu0 0.0
    %1194 = vmatprep.subr.mxu0 0.0
    %1195 = vmatpush1.msra.mxu0 0.0
    %1196 = vmatprep.subr.mxu0 0.0
    %1197 = vmatpush1.msra.mxu0 0.0
    %1198 = vmatprep.subr.mxu0 0.0
    %1199 = vmatpush1.msra.mxu0 0.0
    %1200 = vmatprep.subr.mxu0 0.0
    %1201 = vmatpush1.msra.mxu0 0.0
    %1202 = vmatprep.subr.mxu0 0.0
    %1203 = vmatpush1.msra.mxu0 0.0
    %1204 = vmatprep.subr.mxu0 0.0
    %1205 = vmatpush1.msra.mxu0 0.0
    %1206 = vmatprep.mubr.f32.mxu0 0.0
    %1207 = vmatmul.mubr.f32.gmra.mrb[0].mxu0 %v1140
    %v1208 = vpop.f32.mrb[0].mxu0
    %v1209 = vadd.f32 0.0, %v1208
    %v1210 = vpop.f32.mrb[0].mxu0
    %1211 = vdwg.mxu0
    %v1214 = vrot.slane %v1209, 7
    %v1215 = vsel %vm506, %v1214, %v1133
    %1216 = vrot.lane.b32.xlu0 %v1215, 16
    %v1217 = vpop.permute.xlu0 %1216
    %vm1219 = vcmask 189568
    %1220 = vst.msk [vmem:[#allocation2] sm:$0x3] %vm1219, %v1217
    %1221 = vrot.lane.b32.xlu0 %v149, 104
    %v1222 = vpop.permute.xlu0 %1221
    %1223 = vrot.lane.b32.xlu0 %v149, 72
    %v1224 = vpop.permute.xlu0 %1223
    %v1225 = vsel %vm160, %v1222, 0
    %v1227 = vsel %vm160, %v1224, 0
    %1229 = vmatprep.subr.mxu0 0.0
    %1230 = vmatpush1.xpose.msra.mxu0 %v1227
    %1231 = vmatprep.subr.mxu0 0.0
    %1232 = vmatpush1.xpose.msra.mxu0 0.0
    %1233 = vmatprep.subr.mxu0 0.0
    %1234 = vmatpush1.xpose.msra.mxu0 0.0
    %1235 = vmatprep.subr.mxu0 0.0
    %1236 = vmatpush1.xpose.msra.mxu0 0.0
    %1237 = vmatprep.subr.mxu0 0.0
    %1238 = vmatpush1.xpose.msra.mxu0 0.0
    %1239 = vmatprep.subr.mxu0 0.0
    %1240 = vmatpush1.xpose.msra.mxu0 0.0
    %1241 = vmatprep.subr.mxu0 0.0
    %1242 = vmatpush1.xpose.msra.mxu0 0.0
    %1243 = vmatprep.subr.mxu0 0.0
    %1244 = vmatpush1.xpose.msra.mxu0 0.0
    %1245 = vmatprep.subr.mxu0 0.0
    %1246 = vmatpush1.xpose.msra.mxu0 0.0
    %1247 = vmatprep.subr.mxu0 0.0
    %1248 = vmatpush1.xpose.msra.mxu0 0.0
    %1249 = vmatprep.subr.mxu0 0.0
    %1250 = vmatpush1.xpose.msra.mxu0 0.0
    %1251 = vmatprep.subr.mxu0 0.0
    %1252 = vmatpush1.xpose.msra.mxu0 0.0
    %1253 = vmatprep.subr.mxu0 0.0
    %1254 = vmatpush1.xpose.msra.mxu0 0.0
    %1255 = vmatprep.subr.mxu0 0.0
    %1256 = vmatpush1.xpose.msra.mxu0 0.0
    %1257 = vmatprep.subr.mxu0 0.0
    %1258 = vmatpush1.xpose.msra.mxu0 0.0
    %1259 = vmatprep.subr.mxu0 0.0
    %1260 = vmatpush1.xpose.msra.mxu0 0.0
    %1261 = vmatprep.subr.mxu0 0.0
    %1262 = vmatpush1.xpose.msra.mxu0 0.0
    %1263 = vmatprep.subr.mxu0 0.0
    %1264 = vmatpush1.xpose.msra.mxu0 0.0
    %1265 = vmatprep.subr.mxu0 0.0
    %1266 = vmatpush1.xpose.msra.mxu0 0.0
    %1267 = vmatprep.subr.mxu0 0.0
    %1268 = vmatpush1.xpose.msra.mxu0 0.0
    %1269 = vmatprep.subr.mxu0 0.0
    %1270 = vmatpush1.xpose.msra.mxu0 0.0
    %1271 = vmatprep.subr.mxu0 0.0
    %1272 = vmatpush1.xpose.msra.mxu0 0.0
    %1273 = vmatprep.subr.mxu0 0.0
    %1274 = vmatpush1.xpose.msra.mxu0 0.0
    %1275 = vmatprep.subr.mxu0 0.0
    %1276 = vmatpush1.xpose.msra.mxu0 0.0
    %1277 = vmatprep.subr.mxu0 0.0
    %1278 = vmatpush1.xpose.msra.mxu0 0.0
    %1279 = vmatprep.subr.mxu0 0.0
    %1280 = vmatpush1.xpose.msra.mxu0 0.0
    %1281 = vmatprep.subr.mxu0 0.0
    %1282 = vmatpush1.xpose.msra.mxu0 0.0
    %1283 = vmatprep.subr.mxu0 0.0
    %1284 = vmatpush1.xpose.msra.mxu0 0.0
    %1285 = vmatprep.subr.mxu0 0.0
    %1286 = vmatpush1.xpose.msra.mxu0 0.0
    %1287 = vmatprep.subr.mxu0 0.0
    %1288 = vmatpush1.xpose.msra.mxu0 0.0
    %1289 = vmatprep.subr.mxu0 0.0
    %1290 = vmatpush1.xpose.msra.mxu0 0.0
    %1291 = vmatprep.subr.mxu0 0.0
    %1292 = vmatpush1.xpose.msra.mxu0 0.0
    %1293 = vmatprep.mubr.f32.mxu0 0.0
    %1294 = vmatmul.mubr.f32.gmra.mrb[0].mxu0 %v1225
    %v1295 = vpop.f32.mrb[0].mxu0
    %v1296 = vadd.f32 0.0, %v1295
    %v1297 = vpop.f32.mrb[0].mxu0
    %1298 = vdwg.mxu0
    %1299 = vrot.lane.b32.xlu0 %v154, 104
    %v1300 = vpop.permute.xlu0 %1299
    %1301 = vrot.lane.b32.xlu0 %v154, 72
    %v1302 = vpop.permute.xlu0 %1301
    %v1303 = vsel %vm160, %v1300, 0
    %v1305 = vsel %vm160, %v1302, 0
    %1307 = vmatprep.subr.mxu0 0.0
    %1308 = vmatpush1.xpose.msra.mxu0 %v1305
    %1309 = vmatprep.subr.mxu0 0.0
    %1310 = vmatpush1.xpose.msra.mxu0 0.0
    %1311 = vmatprep.subr.mxu0 0.0
    %1312 = vmatpush1.xpose.msra.mxu0 0.0
    %1313 = vmatprep.subr.mxu0 0.0
    %1314 = vmatpush1.xpose.msra.mxu0 0.0
    %1315 = vmatprep.subr.mxu0 0.0
    %1316 = vmatpush1.xpose.msra.mxu0 0.0
    %1317 = vmatprep.subr.mxu0 0.0
    %1318 = vmatpush1.xpose.msra.mxu0 0.0
    %1319 = vmatprep.subr.mxu0 0.0
    %1320 = vmatpush1.xpose.msra.mxu0 0.0
    %1321 = vmatprep.subr.mxu0 0.0
    %1322 = vmatpush1.xpose.msra.mxu0 0.0
    %1323 = vmatprep.subr.mxu0 0.0
    %1324 = vmatpush1.xpose.msra.mxu0 0.0
    %1325 = vmatprep.subr.mxu0 0.0
    %1326 = vmatpush1.xpose.msra.mxu0 0.0
    %1327 = vmatprep.subr.mxu0 0.0
    %1328 = vmatpush1.xpose.msra.mxu0 0.0
    %1329 = vmatprep.subr.mxu0 0.0
    %1330 = vmatpush1.xpose.msra.mxu0 0.0
    %1331 = vmatprep.subr.mxu0 0.0
    %1332 = vmatpush1.xpose.msra.mxu0 0.0
    %1333 = vmatprep.subr.mxu0 0.0
    %1334 = vmatpush1.xpose.msra.mxu0 0.0
    %1335 = vmatprep.subr.mxu0 0.0
    %1336 = vmatpush1.xpose.msra.mxu0 0.0
    %1337 = vmatprep.subr.mxu0 0.0
    %1338 = vmatpush1.xpose.msra.mxu0 0.0
    %1339 = vmatprep.subr.mxu0 0.0
    %1340 = vmatpush1.xpose.msra.mxu0 0.0
    %1341 = vmatprep.subr.mxu0 0.0
    %1342 = vmatpush1.xpose.msra.mxu0 0.0
    %1343 = vmatprep.subr.mxu0 0.0
    %1344 = vmatpush1.xpose.msra.mxu0 0.0
    %1345 = vmatprep.subr.mxu0 0.0
    %1346 = vmatpush1.xpose.msra.mxu0 0.0
    %1347 = vmatprep.subr.mxu0 0.0
    %1348 = vmatpush1.xpose.msra.mxu0 0.0
    %1349 = vmatprep.subr.mxu0 0.0
    %1350 = vmatpush1.xpose.msra.mxu0 0.0
    %1351 = vmatprep.subr.mxu0 0.0
    %1352 = vmatpush1.xpose.msra.mxu0 0.0
    %1353 = vmatprep.subr.mxu0 0.0
    %1354 = vmatpush1.xpose.msra.mxu0 0.0
    %1355 = vmatprep.subr.mxu0 0.0
    %1356 = vmatpush1.xpose.msra.mxu0 0.0
    %1357 = vmatprep.subr.mxu0 0.0
    %1358 = vmatpush1.xpose.msra.mxu0 0.0
    %1359 = vmatprep.subr.mxu0 0.0
    %1360 = vmatpush1.xpose.msra.mxu0 0.0
    %1361 = vmatprep.subr.mxu0 0.0
    %1362 = vmatpush1.xpose.msra.mxu0 0.0
    %1363 = vmatprep.subr.mxu0 0.0
    %1364 = vmatpush1.xpose.msra.mxu0 0.0
    %1365 = vmatprep.subr.mxu0 0.0
    %1366 = vmatpush1.xpose.msra.mxu0 0.0
    %1367 = vmatprep.subr.mxu0 0.0
    %1368 = vmatpush1.xpose.msra.mxu0 0.0
    %1369 = vmatprep.subr.mxu0 0.0
    %1370 = vmatpush1.xpose.msra.mxu0 0.0
    %1371 = vmatprep.mubr.f32.mxu0 0.0
    %1372 = vmatmul.mubr.f32.gmra.mrb[0].mxu0 %v1303
    %v1373 = vpop.f32.mrb[0].mxu0
    %v1374 = vadd.f32 0.0, %v1373
    %v1375 = vpop.f32.mrb[0].mxu0
    %1376 = vdwg.mxu0
    %v1377 = vsel %vm160, %v1296, -inf
    %1378 = vmax.xlane.f32.xlu0 %v1377
    %v1379 = vpop.xlane.xlu0 %1378
    %v1380 = vsel %vm160, %v1374, -inf
    %1381 = vmax.xlane.f32.xlu0 %v1380
    %v1382 = vpop.xlane.xlu0 %1381
    %v1383 = vsub.f32 %v1296, %v1379
    %v1384 = vsub.f32 %v1374, %v1382
    %v1385 = vmul.f32 %v1383, 1.442695
    %v1386 = vpow.pop %v1385
    %v1387 = vmul.f32 %v1384, 1.442695
    %v1388 = vpow.pop %v1387
    %v1389 = vsel %vm160, %v1386, 0.0
    %1390 = vadd.xlane.f32.xlu0 %v1389
    %v1391 = vpop.xlane.xlu0 %1390
    %v1392 = vsel %vm160, %v1388, 0.0
    %1393 = vadd.xlane.f32.xlu0 %v1392
    %v1394 = vpop.xlane.xlu0 %1393
    %v1395 = vrcp.pop %v1391
    %v1396 = vrcp.pop %v1394
    %v1397 = vmul.f32 %v1386, %v1395
    %v1398 = vmul.f32 %v1388, %v1396
    %v1399 = vsel %vm160, %v1397, 0.0
    %v1400 = vrot.slane %v1399, 4
    %v1401 = vadd.f32 %v1399, %v1400
    %v1402 = vrot.slane %v1401, 2
    %v1403 = vadd.f32 %v1401, %v1402
    %v1404 = vrot.slane %v1403, 1
    %v1405 = vadd.f32 %v1403, %v1404
    %v1406 = vsel %vm160, %v1398, 0.0
    %v1407 = vrot.slane %v1406, 4
    %v1408 = vadd.f32 %v1406, %v1407
    %v1409 = vrot.slane %v1408, 2
    %v1410 = vadd.f32 %v1408, %v1409
    %v1411 = vrot.slane %v1410, 1
    %v1412 = vadd.f32 %v1410, %v1411
    %v1413 = vmul.f32 %v1405, %v348
    %v1414 = vmul.f32 %v1412, %v348
    %1415 = vrot.lane.b32.xlu0 %v149, 40
    %v1416 = vpop.permute.xlu0 %1415
    %v1419 = vsel %vm160, %v1413, 0
    %1421 = vmatprep.subr.mxu0 0.0
    %1422 = vmatpush1.msra.mxu0 %v1416
    %1423 = vmatprep.subr.mxu0 0.0
    %1424 = vmatpush1.msra.mxu0 0.0
    %1425 = vmatprep.subr.mxu0 0.0
    %1426 = vmatpush1.msra.mxu0 0.0
    %1427 = vmatprep.subr.mxu0 0.0
    %1428 = vmatpush1.msra.mxu0 0.0
    %1429 = vmatprep.subr.mxu0 0.0
    %1430 = vmatpush1.msra.mxu0 0.0
    %1431 = vmatprep.subr.mxu0 0.0
    %1432 = vmatpush1.msra.mxu0 0.0
    %1433 = vmatprep.subr.mxu0 0.0
    %1434 = vmatpush1.msra.mxu0 0.0
    %1435 = vmatprep.subr.mxu0 0.0
    %1436 = vmatpush1.msra.mxu0 0.0
    %1437 = vmatprep.subr.mxu0 0.0
    %1438 = vmatpush1.msra.mxu0 0.0
    %1439 = vmatprep.subr.mxu0 0.0
    %1440 = vmatpush1.msra.mxu0 0.0
    %1441 = vmatprep.subr.mxu0 0.0
    %1442 = vmatpush1.msra.mxu0 0.0
    %1443 = vmatprep.subr.mxu0 0.0
    %1444 = vmatpush1.msra.mxu0 0.0
    %1445 = vmatprep.subr.mxu0 0.0
    %1446 = vmatpush1.msra.mxu0 0.0
    %1447 = vmatprep.subr.mxu0 0.0
    %1448 = vmatpush1.msra.mxu0 0.0
    %1449 = vmatprep.subr.mxu0 0.0
    %1450 = vmatpush1.msra.mxu0 0.0
    %1451 = vmatprep.subr.mxu0 0.0
    %1452 = vmatpush1.msra.mxu0 0.0
    %1453 = vmatprep.subr.mxu0 0.0
    %1454 = vmatpush1.msra.mxu0 0.0
    %1455 = vmatprep.subr.mxu0 0.0
    %1456 = vmatpush1.msra.mxu0 0.0
    %1457 = vmatprep.subr.mxu0 0.0
    %1458 = vmatpush1.msra.mxu0 0.0
    %1459 = vmatprep.subr.mxu0 0.0
    %1460 = vmatpush1.msra.mxu0 0.0
    %1461 = vmatprep.subr.mxu0 0.0
    %1462 = vmatpush1.msra.mxu0 0.0
    %1463 = vmatprep.subr.mxu0 0.0
    %1464 = vmatpush1.msra.mxu0 0.0
    %1465 = vmatprep.subr.mxu0 0.0
    %1466 = vmatpush1.msra.mxu0 0.0
    %1467 = vmatprep.subr.mxu0 0.0
    %1468 = vmatpush1.msra.mxu0 0.0
    %1469 = vmatprep.subr.mxu0 0.0
    %1470 = vmatpush1.msra.mxu0 0.0
    %1471 = vmatprep.subr.mxu0 0.0
    %1472 = vmatpush1.msra.mxu0 0.0
    %1473 = vmatprep.subr.mxu0 0.0
    %1474 = vmatpush1.msra.mxu0 0.0
    %1475 = vmatprep.subr.mxu0 0.0
    %1476 = vmatpush1.msra.mxu0 0.0
    %1477 = vmatprep.subr.mxu0 0.0
    %1478 = vmatpush1.msra.mxu0 0.0
    %1479 = vmatprep.subr.mxu0 0.0
    %1480 = vmatpush1.msra.mxu0 0.0
    %1481 = vmatprep.subr.mxu0 0.0
    %1482 = vmatpush1.msra.mxu0 0.0
    %1483 = vmatprep.subr.mxu0 0.0
    %1484 = vmatpush1.msra.mxu0 0.0
    %1485 = vmatprep.mubr.f32.mxu0 0.0
    %1486 = vmatmul.mubr.f32.gmra.mrb[0].mxu0 %v1419
    %v1487 = vpop.f32.mrb[0].mxu0
    %v1488 = vadd.f32 0.0, %v1487
    %v1489 = vpop.f32.mrb[0].mxu0
    %1490 = vdwg.mxu0
    %1491 = vrot.lane.b32.xlu0 %v154, 40
    %v1492 = vpop.permute.xlu0 %1491
    %v1495 = vsel %vm160, %v1414, 0
    %1497 = vmatprep.subr.mxu0 0.0
    %1498 = vmatpush1.msra.mxu0 %v1492
    %1499 = vmatprep.subr.mxu0 0.0
    %1500 = vmatpush1.msra.mxu0 0.0
    %1501 = vmatprep.subr.mxu0 0.0
    %1502 = vmatpush1.msra.mxu0 0.0
    %1503 = vmatprep.subr.mxu0 0.0
    %1504 = vmatpush1.msra.mxu0 0.0
    %1505 = vmatprep.subr.mxu0 0.0
    %1506 = vmatpush1.msra.mxu0 0.0
    %1507 = vmatprep.subr.mxu0 0.0
    %1508 = vmatpush1.msra.mxu0 0.0
    %1509 = vmatprep.subr.mxu0 0.0
    %1510 = vmatpush1.msra.mxu0 0.0
    %1511 = vmatprep.subr.mxu0 0.0
    %1512 = vmatpush1.msra.mxu0 0.0
    %1513 = vmatprep.subr.mxu0 0.0
    %1514 = vmatpush1.msra.mxu0 0.0
    %1515 = vmatprep.subr.mxu0 0.0
    %1516 = vmatpush1.msra.mxu0 0.0
    %1517 = vmatprep.subr.mxu0 0.0
    %1518 = vmatpush1.msra.mxu0 0.0
    %1519 = vmatprep.subr.mxu0 0.0
    %1520 = vmatpush1.msra.mxu0 0.0
    %1521 = vmatprep.subr.mxu0 0.0
    %1522 = vmatpush1.msra.mxu0 0.0
    %1523 = vmatprep.subr.mxu0 0.0
    %1524 = vmatpush1.msra.mxu0 0.0
    %1525 = vmatprep.subr.mxu0 0.0
    %1526 = vmatpush1.msra.mxu0 0.0
    %1527 = vmatprep.subr.mxu0 0.0
    %1528 = vmatpush1.msra.mxu0 0.0
    %1529 = vmatprep.subr.mxu0 0.0
    %1530 = vmatpush1.msra.mxu0 0.0
    %1531 = vmatprep.subr.mxu0 0.0
    %1532 = vmatpush1.msra.mxu0 0.0
    %1533 = vmatprep.subr.mxu0 0.0
    %1534 = vmatpush1.msra.mxu0 0.0
    %1535 = vmatprep.subr.mxu0 0.0
    %1536 = vmatpush1.msra.mxu0 0.0
    %1537 = vmatprep.subr.mxu0 0.0
    %1538 = vmatpush1.msra.mxu0 0.0
    %1539 = vmatprep.subr.mxu0 0.0
    %1540 = vmatpush1.msra.mxu0 0.0
    %1541 = vmatprep.subr.mxu0 0.0
    %1542 = vmatpush1.msra.mxu0 0.0
    %1543 = vmatprep.subr.mxu0 0.0
    %1544 = vmatpush1.msra.mxu0 0.0
    %1545 = vmatprep.subr.mxu0 0.0
    %1546 = vmatpush1.msra.mxu0 0.0
    %1547 = vmatprep.subr.mxu0 0.0
    %1548 = vmatpush1.msra.mxu0 0.0
    %1549 = vmatprep.subr.mxu0 0.0
    %1550 = vmatpush1.msra.mxu0 0.0
    %1551 = vmatprep.subr.mxu0 0.0
    %1552 = vmatpush1.msra.mxu0 0.0
    %1553 = vmatprep.subr.mxu0 0.0
    %1554 = vmatpush1.msra.mxu0 0.0
    %1555 = vmatprep.subr.mxu0 0.0
    %1556 = vmatpush1.msra.mxu0 0.0
    %1557 = vmatprep.subr.mxu0 0.0
    %1558 = vmatpush1.msra.mxu0 0.0
    %1559 = vmatprep.subr.mxu0 0.0
    %1560 = vmatpush1.msra.mxu0 0.0
    %1561 = vmatprep.mubr.f32.mxu0 0.0
    %1562 = vmatmul.mubr.f32.gmra.mrb[0].mxu0 %v1495
    %v1563 = vpop.f32.mrb[0].mxu0
    %v1564 = vadd.f32 0.0, %v1563
    %v1565 = vpop.f32.mrb[0].mxu0
    %1566 = vdwg.mxu0
    %v1569 = vrot.slane %v1564, 7
    %v1570 = vsel %vm506, %v1569, %v1488
    %1571 = vrot.lane.b32.xlu0 %v1570, 24
    %v1572 = vpop.permute.xlu0 %1571
    %vm1574 = vcmask 255168
    %1575 = vst.msk [vmem:[#allocation2] sm:$0x3] %vm1574, %v1572
    %v1576 = vld [vmem:[#allocation2] sm:$0x3]
    %v1577 = vld [vmem:[#allocation8] sm:$0xff]
    %v1578 = vld [vmem:[#allocation8 + $0x8] sm:$0xff]
    %v1579 = vld [vmem:[#allocation8 + $0x10] sm:$0xff]
    %v1580 = vld [vmem:[#allocation8 + $0x18] sm:$0xff]
    %v1581 = vld [vmem:[%s4] sm:$0x1]
    %v1583 = vlaneseq
    %v1584 = vshrl.u32 %v1583, 7
    %v1585 = vsub.s32 0, %v1584
    %v1586 = vrot.slane %v1581, %v1585
    %v1589 = vsel %vm75, %v1576, 0
    %1591 = vmatprep.subr.mxu0 0.0
    %1592 = vmatpush1.msra.mxu0 %v1577
    %1593 = vmatprep.subr.mxu0 0.0
    %1594 = vmatpush1.msra.mxu0 %v1578
    %1595 = vmatprep.subr.mxu0 0.0
    %1596 = vmatpush1.msra.mxu0 %v1579
    %1597 = vmatprep.subr.mxu0 0.0
    %1598 = vmatpush1.msra.mxu0 %v1580
    %1599 = vmatprep.subr.mxu0 0.0
    %1600 = vmatpush1.msra.mxu0 0.0
    %1601 = vmatprep.subr.mxu0 0.0
    %1602 = vmatpush1.msra.mxu0 0.0
    %1603 = vmatprep.subr.mxu0 0.0
    %1604 = vmatpush1.msra.mxu0 0.0
    %1605 = vmatprep.subr.mxu0 0.0
    %1606 = vmatpush1.msra.mxu0 0.0
    %1607 = vmatprep.subr.mxu0 0.0
    %1608 = vmatpush1.msra.mxu0 0.0
    %1609 = vmatprep.subr.mxu0 0.0
    %1610 = vmatpush1.msra.mxu0 0.0
    %1611 = vmatprep.subr.mxu0 0.0
    %1612 = vmatpush1.msra.mxu0 0.0
    %1613 = vmatprep.subr.mxu0 0.0
    %1614 = vmatpush1.msra.mxu0 0.0
    %1615 = vmatprep.subr.mxu0 0.0
    %1616 = vmatpush1.msra.mxu0 0.0
    %1617 = vmatprep.subr.mxu0 0.0
    %1618 = vmatpush1.msra.mxu0 0.0
    %1619 = vmatprep.subr.mxu0 0.0
    %1620 = vmatpush1.msra.mxu0 0.0
    %1621 = vmatprep.subr.mxu0 0.0
    %1622 = vmatpush1.msra.mxu0 0.0
    %1623 = vmatprep.subr.mxu0 0.0
    %1624 = vmatpush1.msra.mxu0 0.0
    %1625 = vmatprep.subr.mxu0 0.0
    %1626 = vmatpush1.msra.mxu0 0.0
    %1627 = vmatprep.subr.mxu0 0.0
    %1628 = vmatpush1.msra.mxu0 0.0
    %1629 = vmatprep.subr.mxu0 0.0
    %1630 = vmatpush1.msra.mxu0 0.0
    %1631 = vmatprep.subr.mxu0 0.0
    %1632 = vmatpush1.msra.mxu0 0.0
    %1633 = vmatprep.subr.mxu0 0.0
    %1634 = vmatpush1.msra.mxu0 0.0
    %1635 = vmatprep.subr.mxu0 0.0
    %1636 = vmatpush1.msra.mxu0 0.0
    %1637 = vmatprep.subr.mxu0 0.0
    %1638 = vmatpush1.msra.mxu0 0.0
    %1639 = vmatprep.subr.mxu0 0.0
    %1640 = vmatpush1.msra.mxu0 0.0
    %1641 = vmatprep.subr.mxu0 0.0
    %1642 = vmatpush1.msra.mxu0 0.0
    %1643 = vmatprep.subr.mxu0 0.0
    %1644 = vmatpush1.msra.mxu0 0.0
    %1645 = vmatprep.subr.mxu0 0.0
    %1646 = vmatpush1.msra.mxu0 0.0
    %1647 = vmatprep.subr.mxu0 0.0
    %1648 = vmatpush1.msra.mxu0 0.0
    %1649 = vmatprep.subr.mxu0 0.0
    %1650 = vmatpush1.msra.mxu0 0.0
    %1651 = vmatprep.subr.mxu0 0.0
    %1652 = vmatpush1.msra.mxu0 0.0
    %1653 = vmatprep.subr.mxu0 0.0
    %1654 = vmatpush1.msra.mxu0 0.0
    %1655 = vmatprep.mubr.f32.mxu0 0.0
    %1656 = vmatmul.mubr.f32.gmra.mrb[0].mxu0 %v1589
    %v1657 = vpop.f32.mrb[0].mxu0
    %v1658 = vadd.f32 %v1586, %v1657
    %v1659 = vpop.f32.mrb[0].mxu0
    %1660 = vdwg.mxu0
    %vm1661 = vcmask 254976
    %v1662 = vsel %vm1661, %v1658, -inf
    %1663 = vmax.xlane.f32.xlu0 %v1662
    %v1664 = vpop.xlane.xlu0 %1663
    %v1665 = vsub.f32 %v1658, %v1664
    %v1666 = vmul.f32 %v1665, 1.442695
    %v1667 = vpow.pop %v1666
    %v1668 = vsel %vm1661, %v1667, 0.0
    %1669 = vadd.xlane.f32.xlu0 %v1668
    %v1670 = vpop.xlane.xlu0 %1669
    %v1671 = vrcp.pop %v1670
    %v1672 = vmul.f32 %v1667, %v1671
    %1673 = vst.msk [vmem:[#allocation9] sm:$0x3] %vm1661, %v1672
    // Predicated region
    $region34: #{tpu_custom_call.1} parent=1 // pred_check
      _
    $region35: #{tpu_custom_call.1} parent=1 // pred_check_branch
      %1675 = sbr.rel (0) target = $region37
    $region36: #{tpu_custom_call.1} parent=1 // pred_region
      %s1677 = ssub.s32 32, 32
      %1678 = vsyncadd [#allocation5], %s1677
      %s1680 = sshll.u32 [#allocation9], 4
      %s1681 = int_to_ptr.vmem [resolvable:$true] %s1680
      %1683 = dma.vmem_to_hbm [thread:$0]  %s1681, 32, %s5, [#allocation5]
    $region37: #{tpu_custom_call.1} parent=1 // pred_fallthru
      _
    // Predicated region
    $region38: #{tpu_custom_call.1} parent=1 // pred_check
      _
    $region39: #{tpu_custom_call.1} parent=1 // pred_check_branch
      %1685 = sbr.rel (0) target = $region41
    $region40: #{tpu_custom_call.1} parent=1 // pred_region
      %1686 = dma.done [#allocation5], 32
    $region41: #{tpu_custom_call.1} parent=1 // pred_fallthru
      _
    %1687 = vsyncpa [#allocation4], 1
    %1688 = vsyncpa [#allocation7], 1
    %1689 = vsyncpa [#allocation5], 1

</llo_original>
